<compile_context>
chip_gen: v6e
topology: v6e:2x2x1
jax: 0.10.0
libtpu: 0.0.40
codegen_flags: <defaults>
</compile_context>

<pallas_src>
import functools

import jax
import jax.numpy as jnp
from jax.experimental import pallas as pl
from jax.experimental.pallas import tpu as pltpu


def _mdta_kernel(xq_ref, xkv_ref, tf_ref, wqkv_ref, bqkv_ref, wo_ref, bo_ref,
                 o_ref, *, num_dims):
    """One (batch, query-block) grid step of MultiDimTFIDFAttention."""
    D = num_dims
    mxu = jnp.bfloat16

    xq = xq_ref[0]                        # (TQ, E) bf16  query rows
    xkv = xkv_ref[0]                      # (S,  E) bf16  key/value rows (same batch)
    tf = tf_ref[0]                        # (1,  S) f32   tfidf[key] * 1/sqrt(E)

    def proj(x_m, head):
        # Leading-axis indexed packed weight head: (E, E) bf16, f32 accumulate.
        return (jnp.dot(x_m, wqkv_ref[head], preferred_element_type=jnp.float32)
                + bqkv_ref[head])

    # ---- per-dim scores s_d = (q_d k_d^T) * tfidf[key]  (f32) ---------------
    scores = []
    values = []
    for d in range(D):
        q_d = proj(xq, d)                                  # (TQ, E) f32
        k_d = proj(xkv, D + d)                             # (S,  E) f32
        v_d = proj(xkv, 2 * D + d)                         # (S,  E) f32
        s_d = jax.lax.dot_general(
            q_d.astype(mxu), k_d.astype(mxu),
            dimension_numbers=(((1,), (1,)), ((), ())),
            preferred_element_type=jnp.float32) * tf       # (TQ, S)
        scores.append(s_d)
        values.append(v_d)

    # ---- softmax over the num_dims axis (per (q, k) pair), all f32 ----------
    if D == 2:
        # 2-way softmax == sigmoid(s0 - s1): one EUP exp + one approx recip.
        e10 = jnp.exp(scores[1] - scores[0])               # (TQ, S)
        p0 = pl.reciprocal(1.0 + e10, approx=True)
        probs = [p0, 1.0 - p0]
    else:
        m = scores[0]
        for d in range(1, D):
            m = jnp.maximum(m, scores[d])
        exps = [jnp.exp(s_d - m) for s_d in scores]
        denom = exps[0]
        for d in range(1, D):
            denom = denom + exps[d]
        inv = pl.reciprocal(denom, approx=True)
        probs = [e_d * inv for e_d in exps]

    # ---- context + output projection -----------------------------------------
    # out = sum_d (probs_d @ v_d) @ Wo_d + bo : accumulate over d against the
    # leading-axis Wo row-blocks instead of concatenating ctx on the lane axis.
    acc = None
    for d in range(D):
        ctx_d = jnp.dot(probs[d].astype(mxu), values[d].astype(mxu),
                        preferred_element_type=jnp.float32)        # (TQ, E)
        term = jnp.dot(ctx_d.astype(mxu), wo_ref[d],
                       preferred_element_type=jnp.float32)         # (TQ, E)
        acc = term if acc is None else acc + term
    o_ref[0] = (acc + bo_ref[...]).astype(o_ref.dtype)             # fused store


def pack_params(params, *, embed_dim, num_dims):
    """One-time packing of the Linear params into kernel-friendly layouts."""
    E, D = embed_dim, num_dims
    wq, bq, wk, bk, wv, bv, wo, bo = params

    def split(w, b):
        # (E, D*E) -> (D, E, E) leading-axis head blocks; bias -> (D, 1, E).
        return jnp.transpose(w.reshape(E, D, E), (1, 0, 2)), b.reshape(D, 1, E)

    wq3, bq3 = split(wq, bq)
    wk3, bk3 = split(wk, bk)
    wv3, bv3 = split(wv, bv)
    w_qkv = jnp.concatenate([wq3, wk3, wv3], axis=0).astype(jnp.bfloat16)  # (3D,E,E)
    b_qkv = jnp.concatenate([bq3, bk3, bv3], axis=0).astype(jnp.float32)   # (3D,1,E)
    wo3 = wo.reshape(D, E, E).astype(jnp.bfloat16)                         # (D,E,E)
    bo2 = bo.reshape(1, E).astype(jnp.float32)                             # (1,E)
    return w_qkv, b_qkv, wo3, bo2


def multi_dim_tfidf_attention(x, tfidf, packed_params, *, embed_dim, num_dims):
    B, S, E = x.shape
    assert E == embed_dim
    D = num_dims
    w_qkv, b_qkv, wo3, bo2 = packed_params

    # Query-block tiling within each batch (one block at toy S; at long S pick
    # a lane/sublane-friendly divisor so (8, 128) tiling holds).
    if S <= 512:
        tq = S
    else:
        tq = next((t for t in (512, 384, 256, 128) if S % t == 0), S)
    qb = S // tq

    # Fold 1/sqrt(E) into the tf-idf factor (indexes the KEY position;
    # broadcasts over queries and dims inside the kernel).
    tf_scaled = (tfidf.astype(jnp.float32) * (E ** -0.5)).reshape(B, 1, S)
    x_bf16 = x.astype(jnp.bfloat16)         # MXU operand; halves x DMA/VMEM

    kernel = functools.partial(_mdta_kernel, num_dims=D)

    # Explicit VMEM budget from the tile plan (+2x headroom), clamped to the
    # smallest physical VMEM across generations (v7x: 64 MiB).
    f32, bf16 = 4, 2
    stream_bytes = (tq * E + S * E) * bf16 + S * f32 + tq * E * f32
    weight_bytes = (3 * D * E * E + D * E * E) * bf16 + (3 * D * E + E) * f32
    interm_bytes = (D * (tq + 2 * S) * E + 3 * tq * S) * f32
    vmem_limit = int(min(64 * 1024 * 1024,
                         max(4 * 1024 * 1024,
                             2 * (2 * stream_bytes + 2 * weight_bytes
                                  + interm_bytes))))

    def run(single_buffer_weights):
        def const_spec(shape):
            nd = len(shape)
            imap = lambda b, qi: (0,) * nd
            if single_buffer_weights:
                # Grid-invariant weights: one resident copy, not double-buffered.
                return pl.BlockSpec(shape, imap, pipeline_mode=pl.Buffered(1))
            return pl.BlockSpec(shape, imap)

        return pl.pallas_call(
            kernel,
            out_shape=jax.ShapeDtypeStruct((B, S, E), x.dtype),
            grid=(B, qb),
            in_specs=[
                pl.BlockSpec((1, tq, E), lambda b, qi: (b, qi, 0)),  # query rows
                pl.BlockSpec((1, S, E), lambda b, qi: (b, 0, 0)),    # key/value rows
                pl.BlockSpec((1, 1, S), lambda b, qi: (b, 0, 0)),    # tfidf * rsqrt(E)
                const_spec((3 * D, E, E)),                           # packed Wqkv
                const_spec((3 * D, 1, E)),                           # packed bqkv
                const_spec((D, E, E)),                               # Wo row-blocks
                const_spec((1, E)),                                  # bo
            ],
            out_specs=pl.BlockSpec((1, tq, E), lambda b, qi: (b, qi, 0)),
            compiler_params=pltpu.CompilerParams(
                dimension_semantics=("parallel", "parallel"),
                vmem_limit_bytes=vmem_limit),
        )(x_bf16, x_bf16, tf_scaled, w_qkv, b_qkv, wo3, bo2)

    try:
        return run(single_buffer_weights=True)
    except Exception:
        # pipeline_mode=pl.Buffered(1) not supported on this JAX version --
        # fall back to default double-buffered specs (same kernel otherwise).
        return run(single_buffer_weights=False)


def reference_forward(x, tfidf, params, *, embed_dim, num_dims):
    """Plain-JAX replica of the PyTorch forward (for validation)."""
    wq, bq, wk, bk, wv, bv, wo, bo = params
    B, S, E = x.shape
    Q = (x @ wq + bq).reshape(B, S, num_dims, E)
    K = (x @ wk + bk).reshape(B, S, num_dims, E)
    V = (x @ wv + bv).reshape(B, S, num_dims, E)
    attn = jnp.einsum('bqde,bkde->bqkd', Q, K) / (E ** 0.5)
    attn = attn * tfidf[:, None, :, None]              # broadcast over q and d
    probs = jax.nn.softmax(attn, axis=-1)              # softmax over num_dims
    ctx = jnp.einsum('bqkd,bkde->bqde', probs, V).reshape(B, S, -1)
    return ctx @ wo + bo


if __name__ == "__main__":
    batch_size = 2
    seq_length = 5
    embed_dim = 16
    num_dims = 2
    num_heads = 4  # unused by the module's forward pass (kept for parity)
    DE = embed_dim * num_dims

    key = jax.random.PRNGKey(0)
    keys = jax.random.split(key, 10)

    x = jax.random.normal(keys[0], (batch_size, seq_length, embed_dim), jnp.float32)
    tfidf = jax.random.uniform(keys[1], (batch_size, seq_length), jnp.float32)

    def init_linear(kw, kb, fan_in, fan_out):
        bound = 1.0 / (fan_in ** 0.5)
        w = jax.random.uniform(kw, (fan_in, fan_out), jnp.float32, -bound, bound)
        b = jax.random.uniform(kb, (fan_out,), jnp.float32, -bound, bound)
        return w, b

    wq, bq = init_linear(keys[2], keys[3], embed_dim, DE)
    wk, bk = init_linear(keys[4], keys[5], embed_dim, DE)
    wv, bv = init_linear(keys[6], keys[7], embed_dim, DE)
    wo, bo = init_linear(keys[8], keys[9], DE, embed_dim)
    params = (wq, bq, wk, bk, wv, bv, wo, bo)

    # Pack weights ONCE at setup (per perf review), not per call.
    packed = pack_params(params, embed_dim=embed_dim, num_dims=num_dims)

    out = multi_dim_tfidf_attention(
        x, tfidf, packed, embed_dim=embed_dim, num_dims=num_dims)
    out = jax.block_until_ready(out)

    ref = reference_forward(x, tfidf, params, embed_dim=embed_dim, num_dims=num_dims)
    assert out.shape == (batch_size, seq_length, embed_dim)
    # bf16 MXU operands (f32 accumulation) + EUP approximate reciprocal in the
    # 2-way softmax => tolerance relaxed vs. the all-f32 reference.
    assert jnp.allclose(out, ref, atol=5e-2, rtol=5e-2), "mismatch vs reference"

    print("KERNEL_OK")
</pallas_src>

<mosaic_0001>
module attributes {stable_mosaic.version = 11 : i64} {
  func.func @_mdta_kernel(%arg0: i32, %arg1: i32, %arg2: memref<1x5x16xbf16, #tpu.memory_space<vmem>>, %arg3: memref<1x5x16xbf16, #tpu.memory_space<vmem>>, %arg4: memref<1x1x5xf32, #tpu.memory_space<vmem>>, %arg5: memref<6x16x16xbf16, #tpu.memory_space<vmem>>, %arg6: memref<6x1x16xf32, #tpu.memory_space<vmem>>, %arg7: memref<2x16x16xbf16, #tpu.memory_space<vmem>>, %arg8: memref<1x16xf32, #tpu.memory_space<vmem>>, %arg9: memref<1x5x16xf32, #tpu.memory_space<vmem>>) attributes {dimension_semantics = [#tpu.dimension_semantics<parallel>, #tpu.dimension_semantics<parallel>], iteration_bounds = array<i64: 2, 1>, scalar_prefetch = 0 : i64, scratch_operands = 0 : i64, tpu.core_type = #tpu.core_type<tc>, window_params = [{transform_indices = @transform_0, window_bounds = array<i64: 1, 5, 16>}, {transform_indices = @transform_1, window_bounds = array<i64: 1, 5, 16>}, {transform_indices = @transform_2, window_bounds = array<i64: 1, 1, 5>}, {pipeline_mode = #tpu.pipeline_mode<synchronous>, transform_indices = @transform_3, window_bounds = array<i64: 6, 16, 16>}, {pipeline_mode = #tpu.pipeline_mode<synchronous>, transform_indices = @transform_4, window_bounds = array<i64: 6, 1, 16>}, {pipeline_mode = #tpu.pipeline_mode<synchronous>, transform_indices = @transform_5, window_bounds = array<i64: 2, 16, 16>}, {pipeline_mode = #tpu.pipeline_mode<synchronous>, transform_indices = @transform_6, window_bounds = array<i64: 1, 16>}, {transform_indices = @transform_7, window_bounds = array<i64: 1, 5, 16>}]} {
    %c0 = arith.constant 0 : index
    %c0_0 = arith.constant 0 : index
    %c0_1 = arith.constant 0 : index
    %0 = vector.load %arg2[%c0, %c0_0, %c0_1] : memref<1x5x16xbf16, #tpu.memory_space<vmem>>, vector<1x5x16xbf16>
    %1 = vector.shape_cast %0 : vector<1x5x16xbf16> to vector<5x16xbf16>
    %c0_2 = arith.constant 0 : index
    %c0_3 = arith.constant 0 : index
    %c0_4 = arith.constant 0 : index
    %2 = vector.load %arg3[%c0_2, %c0_3, %c0_4] : memref<1x5x16xbf16, #tpu.memory_space<vmem>>, vector<1x5x16xbf16>
    %3 = vector.shape_cast %2 : vector<1x5x16xbf16> to vector<5x16xbf16>
    %c0_5 = arith.constant 0 : index
    %c0_6 = arith.constant 0 : index
    %c0_7 = arith.constant 0 : index
    %4 = vector.load %arg4[%c0_5, %c0_6, %c0_7] : memref<1x1x5xf32, #tpu.memory_space<vmem>>, vector<1x1x5xf32>
    %5 = vector.shape_cast %4 : vector<1x1x5xf32> to vector<1x5xf32>
    %c0_8 = arith.constant 0 : index
    %c0_9 = arith.constant 0 : index
    %c0_10 = arith.constant 0 : index
    %6 = vector.load %arg5[%c0_8, %c0_9, %c0_10] : memref<6x16x16xbf16, #tpu.memory_space<vmem>>, vector<1x16x16xbf16>
    %7 = vector.shape_cast %6 : vector<1x16x16xbf16> to vector<16x16xbf16>
    %cst = arith.constant dense<0.000000e+00> : vector<5x16xf32>
    %8 = tpu.matmul %1, %7, %cst {dimension_numbers = #tpu.dot_dimension_numbers<[1], [0], [0], [1], [0, 0, 1, 1], [], []>} : vector<5x16xbf16>, vector<16x16xbf16>, vector<5x16xf32> -> vector<5x16xf32>
    %c0_11 = arith.constant 0 : index
    %c0_12 = arith.constant 0 : index
    %c0_13 = arith.constant 0 : index
    %9 = vector.load %arg6[%c0_11, %c0_12, %c0_13] : memref<6x1x16xf32, #tpu.memory_space<vmem>>, vector<1x1x16xf32>
    %10 = vector.shape_cast %9 : vector<1x1x16xf32> to vector<1x16xf32>
    %11 = vector.broadcast %10 : vector<1x16xf32> to vector<5x16xf32>
    %12 = arith.addf %8, %11 : vector<5x16xf32>
    %c2 = arith.constant 2 : index
    %c0_14 = arith.constant 0 : index
    %c0_15 = arith.constant 0 : index
    %13 = vector.load %arg5[%c2, %c0_14, %c0_15] : memref<6x16x16xbf16, #tpu.memory_space<vmem>>, vector<1x16x16xbf16>
    %14 = vector.shape_cast %13 : vector<1x16x16xbf16> to vector<16x16xbf16>
    %cst_16 = arith.constant dense<0.000000e+00> : vector<5x16xf32>
    %15 = tpu.matmul %3, %14, %cst_16 {dimension_numbers = #tpu.dot_dimension_numbers<[1], [0], [0], [1], [0, 0, 1, 1], [], []>} : vector<5x16xbf16>, vector<16x16xbf16>, vector<5x16xf32> -> vector<5x16xf32>
    %c2_17 = arith.constant 2 : index
    %c0_18 = arith.constant 0 : index
    %c0_19 = arith.constant 0 : index
    %16 = vector.load %arg6[%c2_17, %c0_18, %c0_19] : memref<6x1x16xf32, #tpu.memory_space<vmem>>, vector<1x1x16xf32>
    %17 = vector.shape_cast %16 : vector<1x1x16xf32> to vector<1x16xf32>
    %18 = vector.broadcast %17 : vector<1x16xf32> to vector<5x16xf32>
    %19 = arith.addf %15, %18 : vector<5x16xf32>
    %c4 = arith.constant 4 : index
    %c0_20 = arith.constant 0 : index
    %c0_21 = arith.constant 0 : index
    %20 = vector.load %arg5[%c4, %c0_20, %c0_21] : memref<6x16x16xbf16, #tpu.memory_space<vmem>>, vector<1x16x16xbf16>
    %21 = vector.shape_cast %20 : vector<1x16x16xbf16> to vector<16x16xbf16>
    %cst_22 = arith.constant dense<0.000000e+00> : vector<5x16xf32>
    %22 = tpu.matmul %3, %21, %cst_22 {dimension_numbers = #tpu.dot_dimension_numbers<[1], [0], [0], [1], [0, 0, 1, 1], [], []>} : vector<5x16xbf16>, vector<16x16xbf16>, vector<5x16xf32> -> vector<5x16xf32>
    %c4_23 = arith.constant 4 : index
    %c0_24 = arith.constant 0 : index
    %c0_25 = arith.constant 0 : index
    %23 = vector.load %arg6[%c4_23, %c0_24, %c0_25] : memref<6x1x16xf32, #tpu.memory_space<vmem>>, vector<1x1x16xf32>
    %24 = vector.shape_cast %23 : vector<1x1x16xf32> to vector<1x16xf32>
    %25 = vector.broadcast %24 : vector<1x16xf32> to vector<5x16xf32>
    %26 = arith.addf %22, %25 : vector<5x16xf32>
    %27 = arith.truncf %12 : vector<5x16xf32> to vector<5x16xbf16>
    %28 = arith.truncf %19 : vector<5x16xf32> to vector<5x16xbf16>
    %cst_26 = arith.constant dense<0.000000e+00> : vector<5x5xf32>
    %29 = tpu.matmul %27, %28, %cst_26 {dimension_numbers = #tpu.dot_dimension_numbers<[1], [1], [0], [0], [0, 0, 1, 0], [], []>} : vector<5x16xbf16>, vector<5x16xbf16>, vector<5x5xf32> -> vector<5x5xf32>
    %30 = vector.broadcast %5 : vector<1x5xf32> to vector<5x5xf32>
    %31 = arith.mulf %29, %30 : vector<5x5xf32>
    %c1 = arith.constant 1 : index
    %c0_27 = arith.constant 0 : index
    %c0_28 = arith.constant 0 : index
    %32 = vector.load %arg5[%c1, %c0_27, %c0_28] : memref<6x16x16xbf16, #tpu.memory_space<vmem>>, vector<1x16x16xbf16>
    %33 = vector.shape_cast %32 : vector<1x16x16xbf16> to vector<16x16xbf16>
    %cst_29 = arith.constant dense<0.000000e+00> : vector<5x16xf32>
    %34 = tpu.matmul %1, %33, %cst_29 {dimension_numbers = #tpu.dot_dimension_numbers<[1], [0], [0], [1], [0, 0, 1, 1], [], []>} : vector<5x16xbf16>, vector<16x16xbf16>, vector<5x16xf32> -> vector<5x16xf32>
    %c1_30 = arith.constant 1 : index
    %c0_31 = arith.constant 0 : index
    %c0_32 = arith.constant 0 : index
    %35 = vector.load %arg6[%c1_30, %c0_31, %c0_32] : memref<6x1x16xf32, #tpu.memory_space<vmem>>, vector<1x1x16xf32>
    %36 = vector.shape_cast %35 : vector<1x1x16xf32> to vector<1x16xf32>
    %37 = vector.broadcast %36 : vector<1x16xf32> to vector<5x16xf32>
    %38 = arith.addf %34, %37 : vector<5x16xf32>
    %c3 = arith.constant 3 : index
    %c0_33 = arith.constant 0 : index
    %c0_34 = arith.constant 0 : index
    %39 = vector.load %arg5[%c3, %c0_33, %c0_34] : memref<6x16x16xbf16, #tpu.memory_space<vmem>>, vector<1x16x16xbf16>
    %40 = vector.shape_cast %39 : vector<1x16x16xbf16> to vector<16x16xbf16>
    %cst_35 = arith.constant dense<0.000000e+00> : vector<5x16xf32>
    %41 = tpu.matmul %3, %40, %cst_35 {dimension_numbers = #tpu.dot_dimension_numbers<[1], [0], [0], [1], [0, 0, 1, 1], [], []>} : vector<5x16xbf16>, vector<16x16xbf16>, vector<5x16xf32> -> vector<5x16xf32>
    %c3_36 = arith.constant 3 : index
    %c0_37 = arith.constant 0 : index
    %c0_38 = arith.constant 0 : index
    %42 = vector.load %arg6[%c3_36, %c0_37, %c0_38] : memref<6x1x16xf32, #tpu.memory_space<vmem>>, vector<1x1x16xf32>
    %43 = vector.shape_cast %42 : vector<1x1x16xf32> to vector<1x16xf32>
    %44 = vector.broadcast %43 : vector<1x16xf32> to vector<5x16xf32>
    %45 = arith.addf %41, %44 : vector<5x16xf32>
    %c5 = arith.constant 5 : index
    %c0_39 = arith.constant 0 : index
    %c0_40 = arith.constant 0 : index
    %46 = vector.load %arg5[%c5, %c0_39, %c0_40] : memref<6x16x16xbf16, #tpu.memory_space<vmem>>, vector<1x16x16xbf16>
    %47 = vector.shape_cast %46 : vector<1x16x16xbf16> to vector<16x16xbf16>
    %cst_41 = arith.constant dense<0.000000e+00> : vector<5x16xf32>
    %48 = tpu.matmul %3, %47, %cst_41 {dimension_numbers = #tpu.dot_dimension_numbers<[1], [0], [0], [1], [0, 0, 1, 1], [], []>} : vector<5x16xbf16>, vector<16x16xbf16>, vector<5x16xf32> -> vector<5x16xf32>
    %c5_42 = arith.constant 5 : index
    %c0_43 = arith.constant 0 : index
    %c0_44 = arith.constant 0 : index
    %49 = vector.load %arg6[%c5_42, %c0_43, %c0_44] : memref<6x1x16xf32, #tpu.memory_space<vmem>>, vector<1x1x16xf32>
    %50 = vector.shape_cast %49 : vector<1x1x16xf32> to vector<1x16xf32>
    %51 = vector.broadcast %50 : vector<1x16xf32> to vector<5x16xf32>
    %52 = arith.addf %48, %51 : vector<5x16xf32>
    %53 = arith.truncf %38 : vector<5x16xf32> to vector<5x16xbf16>
    %54 = arith.truncf %45 : vector<5x16xf32> to vector<5x16xbf16>
    %cst_45 = arith.constant dense<0.000000e+00> : vector<5x5xf32>
    %55 = tpu.matmul %53, %54, %cst_45 {dimension_numbers = #tpu.dot_dimension_numbers<[1], [1], [0], [0], [0, 0, 1, 0], [], []>} : vector<5x16xbf16>, vector<5x16xbf16>, vector<5x5xf32> -> vector<5x5xf32>
    %56 = vector.broadcast %5 : vector<1x5xf32> to vector<5x5xf32>
    %57 = arith.mulf %55, %56 : vector<5x5xf32>
    %58 = arith.subf %57, %31 : vector<5x5xf32>
    %59 = math.exp %58 : vector<5x5xf32>
    %cst_46 = arith.constant 1.000000e+00 : f32
    %60 = vector.broadcast %cst_46 : f32 to vector<5x5xf32>
    %61 = arith.addf %60, %59 : vector<5x5xf32>
    %62 = tpu.reciprocal %61 {approx = true} : vector<5x5xf32> -> vector<5x5xf32>
    %cst_47 = arith.constant 1.000000e+00 : f32
    %63 = vector.broadcast %cst_47 : f32 to vector<5x5xf32>
    %64 = arith.subf %63, %62 : vector<5x5xf32>
    %65 = arith.truncf %62 : vector<5x5xf32> to vector<5x5xbf16>
    %66 = arith.truncf %26 : vector<5x16xf32> to vector<5x16xbf16>
    %cst_48 = arith.constant dense<0.000000e+00> : vector<5x16xf32>
    %67 = tpu.matmul %65, %66, %cst_48 {dimension_numbers = #tpu.dot_dimension_numbers<[1], [0], [0], [1], [0, 0, 1, 1], [], []>} : vector<5x5xbf16>, vector<5x16xbf16>, vector<5x16xf32> -> vector<5x16xf32>
    %68 = arith.truncf %67 : vector<5x16xf32> to vector<5x16xbf16>
    %c0_49 = arith.constant 0 : index
    %c0_50 = arith.constant 0 : index
    %c0_51 = arith.constant 0 : index
    %69 = vector.load %arg7[%c0_49, %c0_50, %c0_51] : memref<2x16x16xbf16, #tpu.memory_space<vmem>>, vector<1x16x16xbf16>
    %70 = vector.shape_cast %69 : vector<1x16x16xbf16> to vector<16x16xbf16>
    %cst_52 = arith.constant dense<0.000000e+00> : vector<5x16xf32>
    %71 = tpu.matmul %68, %70, %cst_52 {dimension_numbers = #tpu.dot_dimension_numbers<[1], [0], [0], [1], [0, 0, 1, 1], [], []>} : vector<5x16xbf16>, vector<16x16xbf16>, vector<5x16xf32> -> vector<5x16xf32>
    %72 = arith.truncf %64 : vector<5x5xf32> to vector<5x5xbf16>
    %73 = arith.truncf %52 : vector<5x16xf32> to vector<5x16xbf16>
    %cst_53 = arith.constant dense<0.000000e+00> : vector<5x16xf32>
    %74 = tpu.matmul %72, %73, %cst_53 {dimension_numbers = #tpu.dot_dimension_numbers<[1], [0], [0], [1], [0, 0, 1, 1], [], []>} : vector<5x5xbf16>, vector<5x16xbf16>, vector<5x16xf32> -> vector<5x16xf32>
    %75 = arith.truncf %74 : vector<5x16xf32> to vector<5x16xbf16>
    %c1_54 = arith.constant 1 : index
    %c0_55 = arith.constant 0 : index
    %c0_56 = arith.constant 0 : index
    %76 = vector.load %arg7[%c1_54, %c0_55, %c0_56] : memref<2x16x16xbf16, #tpu.memory_space<vmem>>, vector<1x16x16xbf16>
    %77 = vector.shape_cast %76 : vector<1x16x16xbf16> to vector<16x16xbf16>
    %cst_57 = arith.constant dense<0.000000e+00> : vector<5x16xf32>
    %78 = tpu.matmul %75, %77, %cst_57 {dimension_numbers = #tpu.dot_dimension_numbers<[1], [0], [0], [1], [0, 0, 1, 1], [], []>} : vector<5x16xbf16>, vector<16x16xbf16>, vector<5x16xf32> -> vector<5x16xf32>
    %79 = arith.addf %71, %78 : vector<5x16xf32>
    %c0_58 = arith.constant 0 : index
    %c0_59 = arith.constant 0 : index
    %80 = vector.load %arg8[%c0_58, %c0_59] : memref<1x16xf32, #tpu.memory_space<vmem>>, vector<1x16xf32>
    %81 = vector.broadcast %80 : vector<1x16xf32> to vector<5x16xf32>
    %82 = arith.addf %79, %81 : vector<5x16xf32>
    %c0_60 = arith.constant 0 : index
    %c0_61 = arith.constant 0 : index
    %c0_62 = arith.constant 0 : index
    %83 = vector.load %arg9[%c0_60, %c0_61, %c0_62] : memref<1x5x16xf32, #tpu.memory_space<vmem>>, vector<1x5x16xf32>
    %84 = vector.shape_cast %83 : vector<1x5x16xf32> to vector<5x16xf32>
    %85 = vector.shape_cast %82 : vector<5x16xf32> to vector<1x5x16xf32>
    tpu.vector_store %arg9[%c0_60, %c0_61, %c0_62], %85 {strides = array<i32>} : memref<1x5x16xf32, #tpu.memory_space<vmem>>, vector<1x5x16xf32>,
    return
  }
  func.func @transform_0(%arg0: i32, %arg1: i32) -> (i32, i32, i32) {
    %c0_i32 = arith.constant 0 : i32
    %c0_i32_0 = arith.constant 0 : i32
    return %arg0, %arg1, %c0_i32 : i32, i32, i32
  }
  func.func @transform_1(%arg0: i32, %arg1: i32) -> (i32, i32, i32) {
    %c0_i32 = arith.constant 0 : i32
    %c0_i32_0 = arith.constant 0 : i32
    %c0_i32_1 = arith.constant 0 : i32
    return %arg0, %c0_i32, %c0_i32_0 : i32, i32, i32
  }
  func.func @transform_2(%arg0: i32, %arg1: i32) -> (i32, i32, i32) {
    %c0_i32 = arith.constant 0 : i32
    %c0_i32_0 = arith.constant 0 : i32
    %c0_i32_1 = arith.constant 0 : i32
    return %arg0, %c0_i32, %c0_i32_0 : i32, i32, i32
  }
  func.func @transform_3(%arg0: i32, %arg1: i32) -> (i32, i32, i32) {
    %c0_i32 = arith.constant 0 : i32
    %c0_i32_0 = arith.constant 0 : i32
    %c0_i32_1 = arith.constant 0 : i32
    %c0_i32_2 = arith.constant 0 : i32
    return %c0_i32, %c0_i32_0, %c0_i32_1 : i32, i32, i32
  }
  func.func @transform_4(%arg0: i32, %arg1: i32) -> (i32, i32, i32) {
    %c0_i32 = arith.constant 0 : i32
    %c0_i32_0 = arith.constant 0 : i32
    %c0_i32_1 = arith.constant 0 : i32
    %c0_i32_2 = arith.constant 0 : i32
    return %c0_i32, %c0_i32_0, %c0_i32_1 : i32, i32, i32
  }
  func.func @transform_5(%arg0: i32, %arg1: i32) -> (i32, i32, i32) {
    %c0_i32 = arith.constant 0 : i32
    %c0_i32_0 = arith.constant 0 : i32
    %c0_i32_1 = arith.constant 0 : i32
    %c0_i32_2 = arith.constant 0 : i32
    return %c0_i32, %c0_i32_0, %c0_i32_1 : i32, i32, i32
  }
  func.func @transform_6(%arg0: i32, %arg1: i32) -> (i32, i32) {
    %c0_i32 = arith.constant 0 : i32
    %c0_i32_0 = arith.constant 0 : i32
    %c0_i32_1 = arith.constant 0 : i32
    return %c0_i32, %c0_i32_0 : i32, i32
  }
  func.func @transform_7(%arg0: i32, %arg1: i32) -> (i32, i32, i32) {
    %c0_i32 = arith.constant 0 : i32
    %c0_i32_0 = arith.constant 0 : i32
    return %arg0, %arg1, %c0_i32 : i32, i32, i32
  }
}

module attributes {stable_mosaic.version = 11 : i64} {
  func.func @_mdta_kernel(%arg0: i32, %arg1: i32, %arg2: memref<1x5x16xbf16, #tpu.memory_space<vmem>>, %arg3: memref<1x5x16xbf16, #tpu.memory_space<vmem>>, %arg4: memref<1x1x5xf32, #tpu.memory_space<vmem>>, %arg5: memref<6x16x16xbf16, #tpu.memory_space<vmem>>, %arg6: memref<6x1x16xf32, #tpu.memory_space<vmem>>, %arg7: memref<2x16x16xbf16, #tpu.memory_space<vmem>>, %arg8: memref<1x16xf32, #tpu.memory_space<vmem>>, %arg9: memref<1x5x16xf32, #tpu.memory_space<vmem>>) attributes {dimension_semantics = [#tpu.dimension_semantics<parallel>, #tpu.dimension_semantics<parallel>], iteration_bounds = array<i64: 2, 1>, scalar_prefetch = 0 : i64, scratch_operands = 0 : i64, tpu.core_type = #tpu.core_type<tc>, window_params = [{transform_indices = @transform_0, window_bounds = array<i64: 1, 5, 16>}, {transform_indices = @transform_1, window_bounds = array<i64: 1, 5, 16>}, {transform_indices = @transform_2, window_bounds = array<i64: 1, 1, 5>}, {pipeline_mode = #tpu.pipeline_mode<synchronous>, transform_indices = @transform_3, window_bounds = array<i64: 6, 16, 16>}, {pipeline_mode = #tpu.pipeline_mode<synchronous>, transform_indices = @transform_4, window_bounds = array<i64: 6, 1, 16>}, {pipeline_mode = #tpu.pipeline_mode<synchronous>, transform_indices = @transform_5, window_bounds = array<i64: 2, 16, 16>}, {pipeline_mode = #tpu.pipeline_mode<synchronous>, transform_indices = @transform_6, window_bounds = array<i64: 1, 16>}, {transform_indices = @transform_7, window_bounds = array<i64: 1, 5, 16>}]} {
    %c0 = arith.constant 0 : index
    %c0_0 = arith.constant 0 : index
    %c0_1 = arith.constant 0 : index
    %0 = vector.load %arg2[%c0, %c0_0, %c0_1] : memref<1x5x16xbf16, #tpu.memory_space<vmem>>, vector<1x5x16xbf16>
    %1 = vector.shape_cast %0 : vector<1x5x16xbf16> to vector<5x16xbf16>
    %c0_2 = arith.constant 0 : index
    %c0_3 = arith.constant 0 : index
    %c0_4 = arith.constant 0 : index
    %2 = vector.load %arg3[%c0_2, %c0_3, %c0_4] : memref<1x5x16xbf16, #tpu.memory_space<vmem>>, vector<1x5x16xbf16>
    %3 = vector.shape_cast %2 : vector<1x5x16xbf16> to vector<5x16xbf16>
    %c0_5 = arith.constant 0 : index
    %c0_6 = arith.constant 0 : index
    %c0_7 = arith.constant 0 : index
    %4 = vector.load %arg4[%c0_5, %c0_6, %c0_7] : memref<1x1x5xf32, #tpu.memory_space<vmem>>, vector<1x1x5xf32>
    %5 = vector.shape_cast %4 : vector<1x1x5xf32> to vector<1x5xf32>
    %c0_8 = arith.constant 0 : index
    %c0_9 = arith.constant 0 : index
    %c0_10 = arith.constant 0 : index
    %6 = vector.load %arg5[%c0_8, %c0_9, %c0_10] : memref<6x16x16xbf16, #tpu.memory_space<vmem>>, vector<1x16x16xbf16>
    %7 = vector.shape_cast %6 : vector<1x16x16xbf16> to vector<16x16xbf16>
    %cst = arith.constant dense<0.000000e+00> : vector<5x16xf32>
    %8 = tpu.matmul %1, %7, %cst {dimension_numbers = #tpu.dot_dimension_numbers<[1], [0], [0], [1], [0, 0, 1, 1], [], []>} : vector<5x16xbf16>, vector<16x16xbf16>, vector<5x16xf32> -> vector<5x16xf32>
    %c0_11 = arith.constant 0 : index
    %c0_12 = arith.constant 0 : index
    %c0_13 = arith.constant 0 : index
    %9 = vector.load %arg6[%c0_11, %c0_12, %c0_13] : memref<6x1x16xf32, #tpu.memory_space<vmem>>, vector<1x1x16xf32>
    %10 = vector.shape_cast %9 : vector<1x1x16xf32> to vector<1x16xf32>
    %11 = vector.broadcast %10 : vector<1x16xf32> to vector<5x16xf32>
    %12 = arith.addf %8, %11 : vector<5x16xf32>
    %c2 = arith.constant 2 : index
    %c0_14 = arith.constant 0 : index
    %c0_15 = arith.constant 0 : index
    %13 = vector.load %arg5[%c2, %c0_14, %c0_15] : memref<6x16x16xbf16, #tpu.memory_space<vmem>>, vector<1x16x16xbf16>
    %14 = vector.shape_cast %13 : vector<1x16x16xbf16> to vector<16x16xbf16>
    %cst_16 = arith.constant dense<0.000000e+00> : vector<5x16xf32>
    %15 = tpu.matmul %3, %14, %cst_16 {dimension_numbers = #tpu.dot_dimension_numbers<[1], [0], [0], [1], [0, 0, 1, 1], [], []>} : vector<5x16xbf16>, vector<16x16xbf16>, vector<5x16xf32> -> vector<5x16xf32>
    %c2_17 = arith.constant 2 : index
    %c0_18 = arith.constant 0 : index
    %c0_19 = arith.constant 0 : index
    %16 = vector.load %arg6[%c2_17, %c0_18, %c0_19] : memref<6x1x16xf32, #tpu.memory_space<vmem>>, vector<1x1x16xf32>
    %17 = vector.shape_cast %16 : vector<1x1x16xf32> to vector<1x16xf32>
    %18 = vector.broadcast %17 : vector<1x16xf32> to vector<5x16xf32>
    %19 = arith.addf %15, %18 : vector<5x16xf32>
    %c4 = arith.constant 4 : index
    %c0_20 = arith.constant 0 : index
    %c0_21 = arith.constant 0 : index
    %20 = vector.load %arg5[%c4, %c0_20, %c0_21] : memref<6x16x16xbf16, #tpu.memory_space<vmem>>, vector<1x16x16xbf16>
    %21 = vector.shape_cast %20 : vector<1x16x16xbf16> to vector<16x16xbf16>
    %cst_22 = arith.constant dense<0.000000e+00> : vector<5x16xf32>
    %22 = tpu.matmul %3, %21, %cst_22 {dimension_numbers = #tpu.dot_dimension_numbers<[1], [0], [0], [1], [0, 0, 1, 1], [], []>} : vector<5x16xbf16>, vector<16x16xbf16>, vector<5x16xf32> -> vector<5x16xf32>
    %c4_23 = arith.constant 4 : index
    %c0_24 = arith.constant 0 : index
    %c0_25 = arith.constant 0 : index
    %23 = vector.load %arg6[%c4_23, %c0_24, %c0_25] : memref<6x1x16xf32, #tpu.memory_space<vmem>>, vector<1x1x16xf32>
    %24 = vector.shape_cast %23 : vector<1x1x16xf32> to vector<1x16xf32>
    %25 = vector.broadcast %24 : vector<1x16xf32> to vector<5x16xf32>
    %26 = arith.addf %22, %25 : vector<5x16xf32>
    %27 = arith.truncf %12 : vector<5x16xf32> to vector<5x16xbf16>
    %28 = arith.truncf %19 : vector<5x16xf32> to vector<5x16xbf16>
    %cst_26 = arith.constant dense<0.000000e+00> : vector<5x5xf32>
    %29 = tpu.matmul %27, %28, %cst_26 {dimension_numbers = #tpu.dot_dimension_numbers<[1], [1], [0], [0], [0, 0, 1, 0], [], []>} : vector<5x16xbf16>, vector<5x16xbf16>, vector<5x5xf32> -> vector<5x5xf32>
    %30 = vector.broadcast %5 : vector<1x5xf32> to vector<5x5xf32>
    %31 = arith.mulf %29, %30 : vector<5x5xf32>
    %c1 = arith.constant 1 : index
    %c0_27 = arith.constant 0 : index
    %c0_28 = arith.constant 0 : index
    %32 = vector.load %arg5[%c1, %c0_27, %c0_28] : memref<6x16x16xbf16, #tpu.memory_space<vmem>>, vector<1x16x16xbf16>
    %33 = vector.shape_cast %32 : vector<1x16x16xbf16> to vector<16x16xbf16>
    %cst_29 = arith.constant dense<0.000000e+00> : vector<5x16xf32>
    %34 = tpu.matmul %1, %33, %cst_29 {dimension_numbers = #tpu.dot_dimension_numbers<[1], [0], [0], [1], [0, 0, 1, 1], [], []>} : vector<5x16xbf16>, vector<16x16xbf16>, vector<5x16xf32> -> vector<5x16xf32>
    %c1_30 = arith.constant 1 : index
    %c0_31 = arith.constant 0 : index
    %c0_32 = arith.constant 0 : index
    %35 = vector.load %arg6[%c1_30, %c0_31, %c0_32] : memref<6x1x16xf32, #tpu.memory_space<vmem>>, vector<1x1x16xf32>
    %36 = vector.shape_cast %35 : vector<1x1x16xf32> to vector<1x16xf32>
    %37 = vector.broadcast %36 : vector<1x16xf32> to vector<5x16xf32>
    %38 = arith.addf %34, %37 : vector<5x16xf32>
    %c3 = arith.constant 3 : index
    %c0_33 = arith.constant 0 : index
    %c0_34 = arith.constant 0 : index
    %39 = vector.load %arg5[%c3, %c0_33, %c0_34] : memref<6x16x16xbf16, #tpu.memory_space<vmem>>, vector<1x16x16xbf16>
    %40 = vector.shape_cast %39 : vector<1x16x16xbf16> to vector<16x16xbf16>
    %cst_35 = arith.constant dense<0.000000e+00> : vector<5x16xf32>
    %41 = tpu.matmul %3, %40, %cst_35 {dimension_numbers = #tpu.dot_dimension_numbers<[1], [0], [0], [1], [0, 0, 1, 1], [], []>} : vector<5x16xbf16>, vector<16x16xbf16>, vector<5x16xf32> -> vector<5x16xf32>
    %c3_36 = arith.constant 3 : index
    %c0_37 = arith.constant 0 : index
    %c0_38 = arith.constant 0 : index
    %42 = vector.load %arg6[%c3_36, %c0_37, %c0_38] : memref<6x1x16xf32, #tpu.memory_space<vmem>>, vector<1x1x16xf32>
    %43 = vector.shape_cast %42 : vector<1x1x16xf32> to vector<1x16xf32>
    %44 = vector.broadcast %43 : vector<1x16xf32> to vector<5x16xf32>
    %45 = arith.addf %41, %44 : vector<5x16xf32>
    %c5 = arith.constant 5 : index
    %c0_39 = arith.constant 0 : index
    %c0_40 = arith.constant 0 : index
    %46 = vector.load %arg5[%c5, %c0_39, %c0_40] : memref<6x16x16xbf16, #tpu.memory_space<vmem>>, vector<1x16x16xbf16>
    %47 = vector.shape_cast %46 : vector<1x16x16xbf16> to vector<16x16xbf16>
    %cst_41 = arith.constant dense<0.000000e+00> : vector<5x16xf32>
    %48 = tpu.matmul %3, %47, %cst_41 {dimension_numbers = #tpu.dot_dimension_numbers<[1], [0], [0], [1], [0, 0, 1, 1], [], []>} : vector<5x16xbf16>, vector<16x16xbf16>, vector<5x16xf32> -> vector<5x16xf32>
    %c5_42 = arith.constant 5 : index
    %c0_43 = arith.constant 0 : index
    %c0_44 = arith.constant 0 : index
    %49 = vector.load %arg6[%c5_42, %c0_43, %c0_44] : memref<6x1x16xf32, #tpu.memory_space<vmem>>, vector<1x1x16xf32>
    %50 = vector.shape_cast %49 : vector<1x1x16xf32> to vector<1x16xf32>
    %51 = vector.broadcast %50 : vector<1x16xf32> to vector<5x16xf32>
    %52 = arith.addf %48, %51 : vector<5x16xf32>
    %53 = arith.truncf %38 : vector<5x16xf32> to vector<5x16xbf16>
    %54 = arith.truncf %45 : vector<5x16xf32> to vector<5x16xbf16>
    %cst_45 = arith.constant dense<0.000000e+00> : vector<5x5xf32>
    %55 = tpu.matmul %53, %54, %cst_45 {dimension_numbers = #tpu.dot_dimension_numbers<[1], [1], [0], [0], [0, 0, 1, 0], [], []>} : vector<5x16xbf16>, vector<5x16xbf16>, vector<5x5xf32> -> vector<5x5xf32>
    %56 = vector.broadcast %5 : vector<1x5xf32> to vector<5x5xf32>
    %57 = arith.mulf %55, %56 : vector<5x5xf32>
    %58 = arith.subf %57, %31 : vector<5x5xf32>
    %59 = math.exp %58 : vector<5x5xf32>
    %cst_46 = arith.constant 1.000000e+00 : f32
    %60 = vector.broadcast %cst_46 : f32 to vector<5x5xf32>
    %61 = arith.addf %60, %59 : vector<5x5xf32>
    %62 = tpu.reciprocal %61 {approx = true} : vector<5x5xf32> -> vector<5x5xf32>
    %cst_47 = arith.constant 1.000000e+00 : f32
    %63 = vector.broadcast %cst_47 : f32 to vector<5x5xf32>
    %64 = arith.subf %63, %62 : vector<5x5xf32>
    %65 = arith.truncf %62 : vector<5x5xf32> to vector<5x5xbf16>
    %66 = arith.truncf %26 : vector<5x16xf32> to vector<5x16xbf16>
    %cst_48 = arith.constant dense<0.000000e+00> : vector<5x16xf32>
    %67 = tpu.matmul %65, %66, %cst_48 {dimension_numbers = #tpu.dot_dimension_numbers<[1], [0], [0], [1], [0, 0, 1, 1], [], []>} : vector<5x5xbf16>, vector<5x16xbf16>, vector<5x16xf32> -> vector<5x16xf32>
    %68 = arith.truncf %67 : vector<5x16xf32> to vector<5x16xbf16>
    %c0_49 = arith.constant 0 : index
    %c0_50 = arith.constant 0 : index
    %c0_51 = arith.constant 0 : index
    %69 = vector.load %arg7[%c0_49, %c0_50, %c0_51] : memref<2x16x16xbf16, #tpu.memory_space<vmem>>, vector<1x16x16xbf16>
    %70 = vector.shape_cast %69 : vector<1x16x16xbf16> to vector<16x16xbf16>
    %cst_52 = arith.constant dense<0.000000e+00> : vector<5x16xf32>
    %71 = tpu.matmul %68, %70, %cst_52 {dimension_numbers = #tpu.dot_dimension_numbers<[1], [0], [0], [1], [0, 0, 1, 1], [], []>} : vector<5x16xbf16>, vector<16x16xbf16>, vector<5x16xf32> -> vector<5x16xf32>
    %72 = arith.truncf %64 : vector<5x5xf32> to vector<5x5xbf16>
    %73 = arith.truncf %52 : vector<5x16xf32> to vector<5x16xbf16>
    %cst_53 = arith.constant dense<0.000000e+00> : vector<5x16xf32>
    %74 = tpu.matmul %72, %73, %cst_53 {dimension_numbers = #tpu.dot_dimension_numbers<[1], [0], [0], [1], [0, 0, 1, 1], [], []>} : vector<5x5xbf16>, vector<5x16xbf16>, vector<5x16xf32> -> vector<5x16xf32>
    %75 = arith.truncf %74 : vector<5x16xf32> to vector<5x16xbf16>
    %c1_54 = arith.constant 1 : index
    %c0_55 = arith.constant 0 : index
    %c0_56 = arith.constant 0 : index
    %76 = vector.load %arg7[%c1_54, %c0_55, %c0_56] : memref<2x16x16xbf16, #tpu.memory_space<vmem>>, vector<1x16x16xbf16>
    %77 = vector.shape_cast %76 : vector<1x16x16xbf16> to vector<16x16xbf16>
    %cst_57 = arith.constant dense<0.000000e+00> : vector<5x16xf32>
    %78 = tpu.matmul %75, %77, %cst_57 {dimension_numbers = #tpu.dot_dimension_numbers<[1], [0], [0], [1], [0, 0, 1, 1], [], []>} : vector<5x16xbf16>, vector<16x16xbf16>, vector<5x16xf32> -> vector<5x16xf32>
    %79 = arith.addf %71, %78 : vector<5x16xf32>
    %c0_58 = arith.constant 0 : index
    %c0_59 = arith.constant 0 : index
    %80 = vector.load %arg8[%c0_58, %c0_59] : memref<1x16xf32, #tpu.memory_space<vmem>>, vector<1x16xf32>
    %81 = vector.broadcast %80 : vector<1x16xf32> to vector<5x16xf32>
    %82 = arith.addf %79, %81 : vector<5x16xf32>
    %c0_60 = arith.constant 0 : index
    %c0_61 = arith.constant 0 : index
    %c0_62 = arith.constant 0 : index
    %83 = vector.load %arg9[%c0_60, %c0_61, %c0_62] : memref<1x5x16xf32, #tpu.memory_space<vmem>>, vector<1x5x16xf32>
    %84 = vector.shape_cast %83 : vector<1x5x16xf32> to vector<5x16xf32>
    %85 = vector.shape_cast %82 : vector<5x16xf32> to vector<1x5x16xf32>
    tpu.vector_store %arg9[%c0_60, %c0_61, %c0_62], %85 {strides = array<i32>} : memref<1x5x16xf32, #tpu.memory_space<vmem>>, vector<1x5x16xf32>,
    return
  }
  func.func @transform_0(%arg0: i32, %arg1: i32) -> (i32, i32, i32) {
    %c0_i32 = arith.constant 0 : i32
    %c0_i32_0 = arith.constant 0 : i32
    return %arg0, %arg1, %c0_i32 : i32, i32, i32
  }
  func.func @transform_1(%arg0: i32, %arg1: i32) -> (i32, i32, i32) {
    %c0_i32 = arith.constant 0 : i32
    %c0_i32_0 = arith.constant 0 : i32
    %c0_i32_1 = arith.constant 0 : i32
    return %arg0, %c0_i32, %c0_i32_0 : i32, i32, i32
  }
  func.func @transform_2(%arg0: i32, %arg1: i32) -> (i32, i32, i32) {
    %c0_i32 = arith.constant 0 : i32
    %c0_i32_0 = arith.constant 0 : i32
    %c0_i32_1 = arith.constant 0 : i32
    return %arg0, %c0_i32, %c0_i32_0 : i32, i32, i32
  }
  func.func @transform_3(%arg0: i32, %arg1: i32) -> (i32, i32, i32) {
    %c0_i32 = arith.constant 0 : i32
    %c0_i32_0 = arith.constant 0 : i32
    %c0_i32_1 = arith.constant 0 : i32
    %c0_i32_2 = arith.constant 0 : i32
    return %c0_i32, %c0_i32_0, %c0_i32_1 : i32, i32, i32
  }
  func.func @transform_4(%arg0: i32, %arg1: i32) -> (i32, i32, i32) {
    %c0_i32 = arith.constant 0 : i32
    %c0_i32_0 = arith.constant 0 : i32
    %c0_i32_1 = arith.constant 0 : i32
    %c0_i32_2 = arith.constant 0 : i32
    return %c0_i32, %c0_i32_0, %c0_i32_1 : i32, i32, i32
  }
  func.func @transform_5(%arg0: i32, %arg1: i32) -> (i32, i32, i32) {
    %c0_i32 = arith.constant 0 : i32
    %c0_i32_0 = arith.constant 0 : i32
    %c0_i32_1 = arith.constant 0 : i32
    %c0_i32_2 = arith.constant 0 : i32
    return %c0_i32, %c0_i32_0, %c0_i32_1 : i32, i32, i32
  }
  func.func @transform_6(%arg0: i32, %arg1: i32) -> (i32, i32) {
    %c0_i32 = arith.constant 0 : i32
    %c0_i32_0 = arith.constant 0 : i32
    %c0_i32_1 = arith.constant 0 : i32
    return %c0_i32, %c0_i32_0 : i32, i32
  }
  func.func @transform_7(%arg0: i32, %arg1: i32) -> (i32, i32, i32) {
    %c0_i32 = arith.constant 0 : i32
    %c0_i32_0 = arith.constant 0 : i32
    return %arg0, %arg1, %c0_i32 : i32, i32, i32
  }
}

</mosaic_0001>

<llo_original>
// kernel: tpu_custom_call.1
$region0: #{tpu_custom_call.1}
  #allocation0 [shape = 'u32[]', space=smem, size = 0x4, offset = 0x4, fixed_abs, tag = 'smem constant byte address 0x4 - core index']
  #allocation1 [shape = 'u32[144,128]{1,0:T(1,128)}', space=vmem, size = 0x12000, scoped, tag = 'internal scratch']
  %s0 = inlined_call_operand.vmem [shape: bf16[2,5,16], index: 0, kind: input, shape index: {}]
  %s1 = inlined_call_operand.vmem [shape: bf16[2,5,16], index: 1, kind: input, shape index: {}]
  %s2 = inlined_call_operand.vmem [shape: f32[2,1,5], index: 2, kind: input, shape index: {}]
  %s3 = inlined_call_operand.hbm [shape: bf16[6,16,16], index: 3, kind: input, shape index: {}]
  %s4 = inlined_call_operand.vmem [shape: f32[6,1,16], index: 4, kind: input, shape index: {}]
  %s5 = inlined_call_operand.vmem [shape: bf16[2,16,16], index: 5, kind: input, shape index: {}]
  %s6 = inlined_call_operand.vmem [shape: f32[1,16], index: 6, kind: input, shape index: {}]
  %s7 = inlined_call_operand.vmem [shape: f32[2,5,16], index: 7, kind: output, shape index: {}]
  %s8 = sld [smem:[#allocation0]]
  $region65: #{tpu_custom_call.1} parent=0
    _
  %s10 = ssub.s32 1, %s8
  %s11 = scalar_select 0, %s10, %s8
  $region1: #{tpu_custom_call.1} parent=0
    #allocation2 [shape = 'u8[24576]{0}', space=vmem, size = 0x6000, scoped, tag = 'input window, operand 3, single buffered']
    #allocation3 [shape = 's32[2]{0}', space=sflag, size = 0x8, scoped, tag = 'scoped memory for tpu_custom_call.1']
    %12 = vsyncpa [#allocation3], 0
    loop: start=0, step=1, limit=4
    $region2: #{tpu_custom_call.1} parent=1 // loop_pre_header
      _
    $region3: #{tpu_custom_call.1} parent=1 // loop_header
      %s14 = sphi 0, %s18
      %p15 = scmp.ge.s32.totalorder %s14, 4
      %s21 = sphi 0, %s33
      %s22 = sphi 0, %s29
      %s23 = sphi 0, %s21
      %s24 = sphi 0, %s22
      %s25 = sphi 0, %s23
      %s26 = sphi 0, %s24
      %s38 = sphi 0, %s40
      %s41 = sphi 0, %s38
      %s42 = sphi 0, %s41
      %s58 = sphi 0, %s42
      %s64 = sphi 0, %s66
      %s67 = sphi 0, %s64
      %s68 = sphi 0, %s67
      %s84 = sphi 0, %s68
      %s90 = sphi 0, %s92
      %s93 = sphi 0, %s90
      %s94 = sphi 0, %s93
      %s110 = sphi 0, %s94
      %s114 = sphi 0, %s114
      %s116 = sphi 0, %s114
      %s117 = sphi 0, %s116
      %s131 = sphi 0, %s117
      %s135 = sphi 0, %s135
      %s137 = sphi 0, %s135
      %s138 = sphi 0, %s137
      %s152 = sphi 0, %s138
      %s156 = sphi 0, %s156
      %s158 = sphi 0, %s156
      %s159 = sphi 0, %s158
      %s173 = sphi 0, %s159
      %s177 = sphi 0, %s177
      %s179 = sphi 0, %s177
      %s180 = sphi 0, %s179
      %s194 = sphi 0, %s180
      %s202 = sphi 0, %s204
      %s205 = sphi 0, %s202
      %s206 = sphi 0, %s205
      %s222 = sphi 0, %s206
    $region4: #{tpu_custom_call.1} parent=1 // loop_header_branch
      %17 = sbr.rel (%p15) target = $region8
    $region5: #{tpu_custom_call.1} parent=1 // loop_body
      %s19 = ssub.s32 %s14, 1
      %s20 = ssub.s32 %s14, 2
      %s27 = sadd.s32 1, %s22
      %p28 = scmp.ge.s32.totalorder %s27, 1
      %s29 = scalar_select %p28, 0, %s27
      %s30 = sadd.s32 1, %s21
      %s31 = scalar_select %p28, %s30, %s21
      %p32 = scmp.ge.s32.totalorder %s31, 2
      %s33 = scalar_select %p32, 0, %s31
      %s34 = ssub.s32 %s21, %s33
      %s35 = ssub.s32 %s22, %s29
      %s36 = sor.u32 %s34, %s35
      %p37 = scmp.eq.s32.totalorder %s36, 0
      %s39 = sadd.s32 %s38, 1
      %s40 = scalar_select %p37, %s38, %s39
      %p43 = pneg %p37
      %p44 = scmp.eq.s32.totalorder %s14, 1
      %p45 = por %p43, %p44
      %p46 = scmp.ne.s32.totalorder %s38, %s41
      %p47 = scmp.eq.s32.totalorder %s14, 0
      %p48 = por %p46, %p47
      %p49 = scmp.ne.s32.totalorder %s38, %s41
      %p50 = scmp.eq.s32.totalorder %s19, 1
      %p51 = por %p49, %p50
      %p52 = scmp.ne.s32.totalorder %s41, %s42
      %p53 = scmp.eq.s32.totalorder %s19, 0
      %p54 = por %p52, %p53
      %p55 = scmp.ne.s32.totalorder %s41, %s42
      %p56 = scmp.eq.s32.totalorder %s20, 1
      %p57 = por %p55, %p56
      %p59 = scmp.ne.s32.totalorder %s42, %s58
      %p60 = scmp.eq.s32.totalorder %s20, 0
      %p61 = por %p59, %p60
      %s62 = ssub.s32 %s21, %s33
      %p63 = scmp.eq.s32.totalorder %s62, 0
      %s65 = sadd.s32 %s64, 1
      %s66 = scalar_select %p63, %s64, %s65
      %p69 = pneg %p63
      %p70 = scmp.eq.s32.totalorder %s14, 1
      %p71 = por %p69, %p70
      %p72 = scmp.ne.s32.totalorder %s64, %s67
      %p73 = scmp.eq.s32.totalorder %s14, 0
      %p74 = por %p72, %p73
      %p75 = scmp.ne.s32.totalorder %s64, %s67
      %p76 = scmp.eq.s32.totalorder %s19, 1
      %p77 = por %p75, %p76
      %p78 = scmp.ne.s32.totalorder %s67, %s68
      %p79 = scmp.eq.s32.totalorder %s19, 0
      %p80 = por %p78, %p79
      %p81 = scmp.ne.s32.totalorder %s67, %s68
      %p82 = scmp.eq.s32.totalorder %s20, 1
      %p83 = por %p81, %p82
      %p85 = scmp.ne.s32.totalorder %s68, %s84
      %p86 = scmp.eq.s32.totalorder %s20, 0
      %p87 = por %p85, %p86
      %s88 = ssub.s32 %s21, %s33
      %p89 = scmp.eq.s32.totalorder %s88, 0
      %s91 = sadd.s32 %s90, 1
      %s92 = scalar_select %p89, %s90, %s91
      %p95 = pneg %p89
      %p96 = scmp.eq.s32.totalorder %s14, 1
      %p97 = por %p95, %p96
      %p98 = scmp.ne.s32.totalorder %s90, %s93
      %p99 = scmp.eq.s32.totalorder %s14, 0
      %p100 = por %p98, %p99
      %p101 = scmp.ne.s32.totalorder %s90, %s93
      %p102 = scmp.eq.s32.totalorder %s19, 1
      %p103 = por %p101, %p102
      %p104 = scmp.ne.s32.totalorder %s93, %s94
      %p105 = scmp.eq.s32.totalorder %s19, 0
      %p106 = por %p104, %p105
      %p107 = scmp.ne.s32.totalorder %s93, %s94
      %p108 = scmp.eq.s32.totalorder %s20, 1
      %p109 = por %p107, %p108
      %p111 = scmp.ne.s32.totalorder %s94, %s110
      %p112 = scmp.eq.s32.totalorder %s20, 0
      %p113 = por %p111, %p112
      %s115 = sadd.s32 %s114, 1
      %p118 = scmp.eq.s32.totalorder %s14, 1
      %p119 = scmp.ne.s32.totalorder %s114, %s116
      %p120 = scmp.eq.s32.totalorder %s14, 0
      %p121 = por %p119, %p120
      %p122 = scmp.ne.s32.totalorder %s114, %s116
      %p123 = scmp.eq.s32.totalorder %s19, 1
      %p124 = por %p122, %p123
      %p125 = scmp.ne.s32.totalorder %s116, %s117
      %p126 = scmp.eq.s32.totalorder %s19, 0
      %p127 = por %p125, %p126
      %p128 = scmp.ne.s32.totalorder %s116, %s117
      %p129 = scmp.eq.s32.totalorder %s20, 1
      %p130 = por %p128, %p129
      %p132 = scmp.ne.s32.totalorder %s117, %s131
      %p133 = scmp.eq.s32.totalorder %s20, 0
      %p134 = por %p132, %p133
      %s136 = sadd.s32 %s135, 1
      %p139 = scmp.eq.s32.totalorder %s14, 1
      %p140 = scmp.ne.s32.totalorder %s135, %s137
      %p141 = scmp.eq.s32.totalorder %s14, 0
      %p142 = por %p140, %p141
      %p143 = scmp.ne.s32.totalorder %s135, %s137
      %p144 = scmp.eq.s32.totalorder %s19, 1
      %p145 = por %p143, %p144
      %p146 = scmp.ne.s32.totalorder %s137, %s138
      %p147 = scmp.eq.s32.totalorder %s19, 0
      %p148 = por %p146, %p147
      %p149 = scmp.ne.s32.totalorder %s137, %s138
      %p150 = scmp.eq.s32.totalorder %s20, 1
      %p151 = por %p149, %p150
      %p153 = scmp.ne.s32.totalorder %s138, %s152
      %p154 = scmp.eq.s32.totalorder %s20, 0
      %p155 = por %p153, %p154
      %s157 = sadd.s32 %s156, 1
      %p160 = scmp.eq.s32.totalorder %s14, 1
      %p161 = scmp.ne.s32.totalorder %s156, %s158
      %p162 = scmp.eq.s32.totalorder %s14, 0
      %p163 = por %p161, %p162
      %p164 = scmp.ne.s32.totalorder %s156, %s158
      %p165 = scmp.eq.s32.totalorder %s19, 1
      %p166 = por %p164, %p165
      %p167 = scmp.ne.s32.totalorder %s158, %s159
      %p168 = scmp.eq.s32.totalorder %s19, 0
      %p169 = por %p167, %p168
      %p170 = scmp.ne.s32.totalorder %s158, %s159
      %p171 = scmp.eq.s32.totalorder %s20, 1
      %p172 = por %p170, %p171
      %p174 = scmp.ne.s32.totalorder %s159, %s173
      %p175 = scmp.eq.s32.totalorder %s20, 0
      %p176 = por %p174, %p175
      %s178 = sadd.s32 %s177, 1
      %p181 = scmp.eq.s32.totalorder %s14, 1
      %p182 = scmp.ne.s32.totalorder %s177, %s179
      %p183 = scmp.eq.s32.totalorder %s14, 0
      %p184 = por %p182, %p183
      %p185 = scmp.ne.s32.totalorder %s177, %s179
      %p186 = scmp.eq.s32.totalorder %s19, 1
      %p187 = por %p185, %p186
      %p188 = scmp.ne.s32.totalorder %s179, %s180
      %p189 = scmp.eq.s32.totalorder %s19, 0
      %p190 = por %p188, %p189
      %p191 = scmp.ne.s32.totalorder %s179, %s180
      %p192 = scmp.eq.s32.totalorder %s20, 1
      %p193 = por %p191, %p192
      %p195 = scmp.ne.s32.totalorder %s180, %s194
      %p196 = scmp.eq.s32.totalorder %s20, 0
      %p197 = por %p195, %p196
      %s198 = ssub.s32 %s21, %s33
      %s199 = ssub.s32 %s22, %s29
      %s200 = sor.u32 %s198, %s199
      %p201 = scmp.eq.s32.totalorder %s200, 0
      %s203 = sadd.s32 %s202, 1
      %s204 = scalar_select %p201, %s202, %s203
      %p207 = pneg %p201
      %p208 = scmp.eq.s32.totalorder %s14, 1
      %p209 = por %p207, %p208
      %p210 = scmp.ne.s32.totalorder %s202, %s205
      %p211 = scmp.eq.s32.totalorder %s14, 0
      %p212 = por %p210, %p211
      %p213 = scmp.ne.s32.totalorder %s202, %s205
      %p214 = scmp.eq.s32.totalorder %s19, 1
      %p215 = por %p213, %p214
      %p216 = scmp.ne.s32.totalorder %s205, %s206
      %p217 = scmp.eq.s32.totalorder %s19, 0
      %p218 = por %p216, %p217
      %p219 = scmp.ne.s32.totalorder %s205, %s206
      %p220 = scmp.eq.s32.totalorder %s20, 1
      %p221 = por %p219, %p220
      %p223 = scmp.ne.s32.totalorder %s206, %s222
      %p224 = scmp.eq.s32.totalorder %s20, 0
      %p225 = por %p223, %p224
      %p226 = scmp.le.s32.totalorder 1, %s14
      %p227 = scmp.lt.s32.totalorder %s14, 3
      %p228 = pnand %p226, %p227
      %p229 = pneg %p228
      // Predicated region
      $region9: #{tpu_custom_call.1} parent=5 // pred_check
        _
      $region10: #{tpu_custom_call.1} parent=5 // pred_check_branch
        %231 = sbr.rel (%p228) target = $region12
      $region11: #{tpu_custom_call.1} parent=5 // pred_region
        %s232 = ssub.s32 %s14, 1
        // Predicated region
        $region13: #{tpu_custom_call.1} parent=11 // pred_check
          %p233 = pneg %p127
        $region14: #{tpu_custom_call.1} parent=11 // pred_check_branch
          %235 = sbr.rel (%p233) target = $region16
        $region15: #{tpu_custom_call.1} parent=11 // pred_region
          %s237 = ssub.s32 768, 768
          %238 = vsyncadd [#allocation3], %s237
          %s239 = sshll.u32 [#allocation2], 4
          %s240 = int_to_ptr.vmem [resolvable:$true] %s239
          %245 = dma.hbm_to_vmem [thread:$0]  %s3, 768, %s240, [#allocation3], 64, 64, 4
        $region16: #{tpu_custom_call.1} parent=11 // pred_fallthru
          _
        // Predicated region
        $region17: #{tpu_custom_call.1} parent=11 // pred_check
          %p246 = pneg %p148
        $region18: #{tpu_custom_call.1} parent=11 // pred_check_branch
          %248 = sbr.rel (%p246) target = $region20
        $region19: #{tpu_custom_call.1} parent=11 // pred_region
          _
        $region20: #{tpu_custom_call.1} parent=11 // pred_fallthru
          _
        // Predicated region
        $region21: #{tpu_custom_call.1} parent=11 // pred_check
          %p249 = pneg %p169
        $region22: #{tpu_custom_call.1} parent=11 // pred_check_branch
          %251 = sbr.rel (%p249) target = $region24
        $region23: #{tpu_custom_call.1} parent=11 // pred_region
          _
        $region24: #{tpu_custom_call.1} parent=11 // pred_fallthru
          _
        // Predicated region
        $region25: #{tpu_custom_call.1} parent=11 // pred_check
          %p252 = pneg %p190
        $region26: #{tpu_custom_call.1} parent=11 // pred_check_branch
          %254 = sbr.rel (%p252) target = $region28
        $region27: #{tpu_custom_call.1} parent=11 // pred_region
          _
        $region28: #{tpu_custom_call.1} parent=11 // pred_fallthru
          _
      $region12: #{tpu_custom_call.1} parent=5 // pred_fallthru
        _
      %p255 = scmp.lt.s32.totalorder %s14, 2
      // Predicated region
      $region29: #{tpu_custom_call.1} parent=5 // pred_check
        %p256 = pneg %p255
      $region30: #{tpu_custom_call.1} parent=5 // pred_check_branch
        %258 = sbr.rel (%p256) target = $region32
      $region31: #{tpu_custom_call.1} parent=5 // pred_region
        // Predicated region
        $region33: #{tpu_custom_call.1} parent=31 // pred_check
          %p259 = pneg %p48
        $region34: #{tpu_custom_call.1} parent=31 // pred_check_branch
          %261 = sbr.rel (%p259) target = $region36
        $region35: #{tpu_custom_call.1} parent=31 // pred_region
          %p262 = scmp.lt.s32.totalorder %s21, 1
          %s263 = scalar_select %p262, %s21, 1
          %p264 = scmp.lt.s32.totalorder %s22, 0
          %s265 = scalar_select %p264, %s22, 0
          %s266 = sadd.s32 %s265, %s263
          %s267 = smul.addr %s266, 4
          %s268 = scalar_lea.vmem %s0, %s267
        $region36: #{tpu_custom_call.1} parent=31 // pred_fallthru
          _
        // Predicated region
        $region37: #{tpu_custom_call.1} parent=31 // pred_check
          %p269 = pneg %p74
        $region38: #{tpu_custom_call.1} parent=31 // pred_check_branch
          %271 = sbr.rel (%p269) target = $region40
        $region39: #{tpu_custom_call.1} parent=31 // pred_region
          %p272 = scmp.lt.s32.totalorder %s21, 1
          %s273 = scalar_select %p272, %s21, 1
          %s274 = smul.addr %s273, 4
          %s275 = scalar_lea.vmem %s1, %s274
        $region40: #{tpu_custom_call.1} parent=31 // pred_fallthru
          _
        // Predicated region
        $region41: #{tpu_custom_call.1} parent=31 // pred_check
          %p276 = pneg %p100
        $region42: #{tpu_custom_call.1} parent=31 // pred_check_branch
          %278 = sbr.rel (%p276) target = $region44
        $region43: #{tpu_custom_call.1} parent=31 // pred_region
          %p279 = scmp.lt.s32.totalorder %s21, 1
          %s280 = scalar_select %p279, %s21, 1
          %s281 = scalar_lea.vmem %s2, %s280
        $region44: #{tpu_custom_call.1} parent=31 // pred_fallthru
          _
      $region32: #{tpu_custom_call.1} parent=5 // pred_fallthru
        _
      %p282 = scmp.le.s32.totalorder 1, %s14
      %p283 = scmp.lt.s32.totalorder %s14, 3
      %p284 = pnand %p282, %p283
      %p285 = pneg %p284
      // Predicated region
      $region45: #{tpu_custom_call.1} parent=5 // pred_check
        _
      $region46: #{tpu_custom_call.1} parent=5 // pred_check_branch
        %287 = sbr.rel (%p284) target = $region48
      $region47: #{tpu_custom_call.1} parent=5 // pred_region
        %s288 = ssub.s32 %s14, 1
        // Predicated region
        $region49: #{tpu_custom_call.1} parent=47 // pred_check
          %p289 = pneg %p127
        $region50: #{tpu_custom_call.1} parent=47 // pred_check_branch
          %291 = sbr.rel (%p289) target = $region52
        $region51: #{tpu_custom_call.1} parent=47 // pred_region
          %292 = dma.done [#allocation3], 768
        $region52: #{tpu_custom_call.1} parent=47 // pred_fallthru
          _
        %p293 = scmp.lt.s32.totalorder %s23, 1
        %s294 = scalar_select %p293, %s23, 1
        %p295 = scmp.lt.s32.totalorder %s24, 0
        %s296 = scalar_select %p295, %s24, 0
        %s297 = sadd.s32 %s296, %s294
        %s298 = smul.addr %s297, 4
        %s299 = scalar_lea.vmem %s0, %s298
        %p300 = pneg %p54
        %p301 = pneg %p51
        %p302 = scmp.lt.s32.totalorder %s23, 1
        %s303 = scalar_select %p302, %s23, 1
        %s304 = smul.addr %s303, 4
        %s305 = scalar_lea.vmem %s1, %s304
        %p306 = pneg %p80
        %p307 = pneg %p77
        %p308 = scmp.lt.s32.totalorder %s23, 1
        %s309 = scalar_select %p308, %s23, 1
        %s310 = scalar_lea.vmem %s2, %s309
        %p311 = pneg %p106
        %p312 = pneg %p103
        %p313 = pneg %p127
        %p314 = pneg %p124
        %p315 = pneg %p148
        %p316 = pneg %p145
        %p317 = pneg %p169
        %p318 = pneg %p166
        %p319 = pneg %p190
        %p320 = pneg %p187
        %p321 = pneg %p218
        %p322 = pneg %p215
        %p323 = scmp.lt.s32.totalorder %s23, 1
        %s324 = scalar_select %p323, %s23, 1
        %p325 = scmp.lt.s32.totalorder %s24, 0
        %s326 = scalar_select %p325, %s24, 0
        %s327 = sadd.s32 %s326, %s324
        %s328 = smul.addr %s327, 8
        %s329 = scalar_lea.vmem %s7, %s328
        %p330 = scmp.lt.s32.totalorder %s23, 1
        %s331 = scalar_select %p330, %s23, 1
        %p332 = scmp.lt.s32.totalorder %s24, 0
        %s333 = scalar_select %p332, %s24, 0
        %s334 = sadd.s32 %s333, %s331
        %s335 = smul.addr %s334, 4
        %s336 = scalar_lea.vmem %s0, %s335
        %p337 = scmp.lt.s32.totalorder %s23, 1
        %s338 = scalar_select %p337, %s23, 1
        %s339 = smul.addr %s338, 4
        %s340 = scalar_lea.vmem %s1, %s339
        %p341 = scmp.lt.s32.totalorder %s23, 1
        %s342 = scalar_select %p341, %s23, 1
        %s343 = scalar_lea.vmem %s2, %s342
        %p344 = scmp.lt.s32.totalorder %s23, 1
        %s345 = scalar_select %p344, %s23, 1
        %p346 = scmp.lt.s32.totalorder %s24, 0
        %s347 = scalar_select %p346, %s24, 0
        %s348 = sadd.s32 %s347, %s345
        %s349 = smul.addr %s348, 8
        %s350 = scalar_lea.vmem %s7, %s349
        %v352 = vld [vmem:[%s336] sm:$0x7]
        %v353 = vld [vmem:[%s340] sm:$0x7]
        %v354 = vld [vmem:[%s343] sm:$0x1]
        %v355 = vld [vmem:[#allocation2] sm:$0xf]
        %v356 = vld [vmem:[#allocation2 + $0x4] sm:$0xf]
        %v357 = vld [vmem:[%s4] sm:$0x1]
        %v359 = vlaneseq
        %v360 = vshrl.u32 %v359, 7
        %v361 = vsub.s32 0, %v360
        %v362 = vrot.slane %v357, %v361
        %v366 = vunpack.c.l.b16 %v355
        %v367 = vunpack.c.l.b16 %v356
        %v368 = vpack.c.b16 %v367, %v366
        %vm370 = vcmask 130048
        %v372 = vsel %vm370, %v352, 0
        %374 = vmatprep.subr.bf16.mxu0 0
        %375 = vmatpush1.bf16.msra.mxu0 0
        %376 = vmatprep.subr.bf16.mxu0 0
        %377 = vmatpush1.bf16.msra.mxu0 0
        %378 = vmatprep.subr.bf16.mxu0 0
        %379 = vmatpush1.bf16.msra.mxu0 0
        %380 = vmatprep.subr.bf16.mxu0 0
        %381 = vmatpush1.bf16.msra.mxu0 0
        %382 = vmatprep.subr.bf16.mxu0 0
        %383 = vmatpush1.bf16.msra.mxu0 0
        %384 = vmatprep.subr.bf16.mxu0 0
        %385 = vmatpush1.bf16.msra.mxu0 0
        %386 = vmatprep.subr.bf16.mxu0 0
        %387 = vmatpush1.bf16.msra.mxu0 0
        %388 = vmatprep.subr.bf16.mxu0 0
        %389 = vmatpush1.bf16.msra.mxu0 %v368
        %390 = vmatprep.subr.bf16.mxu0 0
        %391 = vmatpush2.bf16.msra.mxu0 0
        %392 = vmatprep.subr.bf16.mxu0 0
        %393 = vmatpush2.bf16.msra.mxu0 0
        %394 = vmatprep.subr.bf16.mxu0 0
        %395 = vmatpush2.bf16.msra.mxu0 0
        %396 = vmatprep.subr.bf16.mxu0 0
        %397 = vmatpush2.bf16.msra.mxu0 0
        %398 = vmatprep.subr.bf16.mxu0 0
        %399 = vmatpush2.bf16.msra.mxu0 0
        %400 = vmatprep.subr.bf16.mxu0 0
        %401 = vmatpush2.bf16.msra.mxu0 0
        %402 = vmatprep.subr.bf16.mxu0 0
        %403 = vmatpush2.bf16.msra.mxu0 0
        %404 = vmatprep.subr.bf16.mxu0 0
        %405 = vmatpush2.bf16.msra.mxu0 0
        %406 = vmatprep.mubr.bf16.mxu0 0
        %407 = vmatmul.mubr.bf16.gmra.mxu0 %v372
        %v408 = vpop.f32.mrf.mxu0
        %v409 = vadd.f32 %v362, %v408
        %v410 = vpop.f32.mrf.mxu0
        %v411 = vpop.f32.mrf.mxu0
        %v412 = vpop.f32.mrf.mxu0
        %413 = vdwg.mxu0
        %s414 = scalar_lea.vmem [#allocation2], 16
        %v415 = vld [vmem:[%s414] sm:$0xf]
        %v416 = vld [vmem:[%s414 + $0x4] sm:$0xf]
        %s417 = scalar_lea.vmem %s4, 2
        %v418 = vld [vmem:[%s417] sm:$0x1]
        %v420 = vlaneseq
        %v421 = vshrl.u32 %v420, 7
        %v422 = vsub.s32 0, %v421
        %v423 = vrot.slane %v418, %v422
        %v427 = vunpack.c.l.b16 %v415
        %v428 = vunpack.c.l.b16 %v416
        %v429 = vpack.c.b16 %v428, %v427
        %v432 = vsel %vm370, %v353, 0
        %434 = vmatprep.subr.bf16.mxu0 0
        %435 = vmatpush1.bf16.msra.mxu0 0
        %436 = vmatprep.subr.bf16.mxu0 0
        %437 = vmatpush1.bf16.msra.mxu0 0
        %438 = vmatprep.subr.bf16.mxu0 0
        %439 = vmatpush1.bf16.msra.mxu0 0
        %440 = vmatprep.subr.bf16.mxu0 0
        %441 = vmatpush1.bf16.msra.mxu0 0
        %442 = vmatprep.subr.bf16.mxu0 0
        %443 = vmatpush1.bf16.msra.mxu0 0
        %444 = vmatprep.subr.bf16.mxu0 0
        %445 = vmatpush1.bf16.msra.mxu0 0
        %446 = vmatprep.subr.bf16.mxu0 0
        %447 = vmatpush1.bf16.msra.mxu0 0
        %448 = vmatprep.subr.bf16.mxu0 0
        %449 = vmatpush1.bf16.msra.mxu0 %v429
        %450 = vmatprep.subr.bf16.mxu0 0
        %451 = vmatpush2.bf16.msra.mxu0 0
        %452 = vmatprep.subr.bf16.mxu0 0
        %453 = vmatpush2.bf16.msra.mxu0 0
        %454 = vmatprep.subr.bf16.mxu0 0
        %455 = vmatpush2.bf16.msra.mxu0 0
        %456 = vmatprep.subr.bf16.mxu0 0
        %457 = vmatpush2.bf16.msra.mxu0 0
        %458 = vmatprep.subr.bf16.mxu0 0
        %459 = vmatpush2.bf16.msra.mxu0 0
        %460 = vmatprep.subr.bf16.mxu0 0
        %461 = vmatpush2.bf16.msra.mxu0 0
        %462 = vmatprep.subr.bf16.mxu0 0
        %463 = vmatpush2.bf16.msra.mxu0 0
        %464 = vmatprep.subr.bf16.mxu0 0
        %465 = vmatpush2.bf16.msra.mxu0 0
        %466 = vmatprep.mubr.bf16.mxu0 0
        %467 = vmatmul.mubr.bf16.gmra.mxu0 %v432
        %v468 = vpop.f32.mrf.mxu0
        %v469 = vadd.f32 %v423, %v468
        %v470 = vpop.f32.mrf.mxu0
        %v471 = vpop.f32.mrf.mxu0
        %v472 = vpop.f32.mrf.mxu0
        %473 = vdwg.mxu0
        %s474 = scalar_lea.vmem [#allocation2], 32
        %v475 = vld [vmem:[%s474] sm:$0xf]
        %v476 = vld [vmem:[%s474 + $0x4] sm:$0xf]
        %s477 = scalar_lea.vmem %s4, 4
        %v478 = vld [vmem:[%s477] sm:$0x1]
        %v480 = vlaneseq
        %v481 = vshrl.u32 %v480, 7
        %v482 = vsub.s32 0, %v481
        %v483 = vrot.slane %v478, %v482
        %v487 = vunpack.c.l.b16 %v475
        %v488 = vunpack.c.l.b16 %v476
        %v489 = vpack.c.b16 %v488, %v487
        %491 = vmatprep.subr.bf16.mxu0 0
        %492 = vmatpush1.bf16.msra.mxu0 0
        %493 = vmatprep.subr.bf16.mxu0 0
        %494 = vmatpush1.bf16.msra.mxu0 0
        %495 = vmatprep.subr.bf16.mxu0 0
        %496 = vmatpush1.bf16.msra.mxu0 0
        %497 = vmatprep.subr.bf16.mxu0 0
        %498 = vmatpush1.bf16.msra.mxu0 0
        %499 = vmatprep.subr.bf16.mxu0 0
        %500 = vmatpush1.bf16.msra.mxu0 0
        %501 = vmatprep.subr.bf16.mxu0 0
        %502 = vmatpush1.bf16.msra.mxu0 0
        %503 = vmatprep.subr.bf16.mxu0 0
        %504 = vmatpush1.bf16.msra.mxu0 0
        %505 = vmatprep.subr.bf16.mxu0 0
        %506 = vmatpush1.bf16.msra.mxu0 %v489
        %507 = vmatprep.subr.bf16.mxu0 0
        %508 = vmatpush2.bf16.msra.mxu0 0
        %509 = vmatprep.subr.bf16.mxu0 0
        %510 = vmatpush2.bf16.msra.mxu0 0
        %511 = vmatprep.subr.bf16.mxu0 0
        %512 = vmatpush2.bf16.msra.mxu0 0
        %513 = vmatprep.subr.bf16.mxu0 0
        %514 = vmatpush2.bf16.msra.mxu0 0
        %515 = vmatprep.subr.bf16.mxu0 0
        %516 = vmatpush2.bf16.msra.mxu0 0
        %517 = vmatprep.subr.bf16.mxu0 0
        %518 = vmatpush2.bf16.msra.mxu0 0
        %519 = vmatprep.subr.bf16.mxu0 0
        %520 = vmatpush2.bf16.msra.mxu0 0
        %521 = vmatprep.subr.bf16.mxu0 0
        %522 = vmatpush2.bf16.msra.mxu0 0
        %523 = vmatprep.mubr.bf16.mxu0 0
        %524 = vmatmul.mubr.bf16.gmra.mxu0 %v432
        %v525 = vpop.f32.mrf.mxu0
        %v526 = vadd.f32 %v483, %v525
        %v527 = vpop.f32.mrf.mxu0
        %v528 = vpop.f32.mrf.mxu0
        %v529 = vpop.f32.mrf.mxu0
        %530 = vdwg.mxu0
        %v531 = vpack.c.bf16 %v409, %v409
        %v532 = vpack.c.bf16 %v469, %v469
        %v534 = vsel %vm370, %v531, 0
        %v537 = vsel %vm370, %v532, 0
        %539 = vmatprep.subr.bf16.mxu0 0
        %540 = vmatpush1.bf16.xpose.msra.mxu0 0
        %541 = vmatprep.subr.bf16.mxu0 0
        %542 = vmatpush1.bf16.xpose.msra.mxu0 0
        %543 = vmatprep.subr.bf16.mxu0 0
        %544 = vmatpush1.bf16.xpose.msra.mxu0 0
        %545 = vmatprep.subr.bf16.mxu0 0
        %546 = vmatpush1.bf16.xpose.msra.mxu0 0
        %547 = vmatprep.subr.bf16.mxu0 0
        %548 = vmatpush1.bf16.xpose.msra.mxu0 0
        %549 = vmatprep.subr.bf16.mxu0 0
        %550 = vmatpush1.bf16.xpose.msra.mxu0 0
        %551 = vmatprep.subr.bf16.mxu0 0
        %552 = vmatpush1.bf16.xpose.msra.mxu0 0
        %553 = vmatprep.subr.bf16.mxu0 0
        %554 = vmatpush1.bf16.xpose.msra.mxu0 %v537
        %555 = vmatprep.subr.bf16.mxu0 0
        %556 = vmatpush2.bf16.xpose.msra.mxu0 0
        %557 = vmatprep.subr.bf16.mxu0 0
        %558 = vmatpush2.bf16.xpose.msra.mxu0 0
        %559 = vmatprep.subr.bf16.mxu0 0
        %560 = vmatpush2.bf16.xpose.msra.mxu0 0
        %561 = vmatprep.subr.bf16.mxu0 0
        %562 = vmatpush2.bf16.xpose.msra.mxu0 0
        %563 = vmatprep.subr.bf16.mxu0 0
        %564 = vmatpush2.bf16.xpose.msra.mxu0 0
        %565 = vmatprep.subr.bf16.mxu0 0
        %566 = vmatpush2.bf16.xpose.msra.mxu0 0
        %567 = vmatprep.subr.bf16.mxu0 0
        %568 = vmatpush2.bf16.xpose.msra.mxu0 0
        %569 = vmatprep.subr.bf16.mxu0 0
        %570 = vmatpush2.bf16.xpose.msra.mxu0 0
        %571 = vmatprep.mubr.bf16.mxu0 0
        %572 = vmatmul.mubr.bf16.gmra.mxu0 %v534
        %v573 = vpop.f32.mrf.mxu0
        %v574 = vadd.f32 0.0, %v573
        %v575 = vpop.f32.mrf.mxu0
        %v576 = vpop.f32.mrf.mxu0
        %v577 = vpop.f32.mrf.mxu0
        %578 = vdwg.mxu0
        %v580 = vlaneseq
        %v581 = vshrl.u32 %v580, 7
        %v582 = vsub.s32 0, %v581
        %v583 = vrot.slane %v354, %v582
        %v585 = vmul.f32 %v574, %v583
        %s586 = scalar_lea.vmem [#allocation2], 8
        %v587 = vld [vmem:[%s586] sm:$0xf]
        %v588 = vld [vmem:[%s586 + $0x4] sm:$0xf]
        %s589 = scalar_lea.vmem %s4, 1
        %v590 = vld [vmem:[%s589] sm:$0x1]
        %v592 = vlaneseq
        %v593 = vshrl.u32 %v592, 7
        %v594 = vsub.s32 0, %v593
        %v595 = vrot.slane %v590, %v594
        %v599 = vunpack.c.l.b16 %v587
        %v600 = vunpack.c.l.b16 %v588
        %v601 = vpack.c.b16 %v600, %v599
        %603 = vmatprep.subr.bf16.mxu0 0
        %604 = vmatpush1.bf16.msra.mxu0 0
        %605 = vmatprep.subr.bf16.mxu0 0
        %606 = vmatpush1.bf16.msra.mxu0 0
        %607 = vmatprep.subr.bf16.mxu0 0
        %608 = vmatpush1.bf16.msra.mxu0 0
        %609 = vmatprep.subr.bf16.mxu0 0
        %610 = vmatpush1.bf16.msra.mxu0 0
        %611 = vmatprep.subr.bf16.mxu0 0
        %612 = vmatpush1.bf16.msra.mxu0 0
        %613 = vmatprep.subr.bf16.mxu0 0
        %614 = vmatpush1.bf16.msra.mxu0 0
        %615 = vmatprep.subr.bf16.mxu0 0
        %616 = vmatpush1.bf16.msra.mxu0 0
        %617 = vmatprep.subr.bf16.mxu0 0
        %618 = vmatpush1.bf16.msra.mxu0 %v601
        %619 = vmatprep.subr.bf16.mxu0 0
        %620 = vmatpush2.bf16.msra.mxu0 0
        %621 = vmatprep.subr.bf16.mxu0 0
        %622 = vmatpush2.bf16.msra.mxu0 0
        %623 = vmatprep.subr.bf16.mxu0 0
        %624 = vmatpush2.bf16.msra.mxu0 0
        %625 = vmatprep.subr.bf16.mxu0 0
        %626 = vmatpush2.bf16.msra.mxu0 0
        %627 = vmatprep.subr.bf16.mxu0 0
        %628 = vmatpush2.bf16.msra.mxu0 0
        %629 = vmatprep.subr.bf16.mxu0 0
        %630 = vmatpush2.bf16.msra.mxu0 0
        %631 = vmatprep.subr.bf16.mxu0 0
        %632 = vmatpush2.bf16.msra.mxu0 0
        %633 = vmatprep.subr.bf16.mxu0 0
        %634 = vmatpush2.bf16.msra.mxu0 0
        %635 = vmatprep.mubr.bf16.mxu0 0
        %636 = vmatmul.mubr.bf16.gmra.mxu0 %v372
        %v637 = vpop.f32.mrf.mxu0
        %v638 = vadd.f32 %v595, %v637
        %v639 = vpop.f32.mrf.mxu0
        %v640 = vpop.f32.mrf.mxu0
        %v641 = vpop.f32.mrf.mxu0
        %642 = vdwg.mxu0
        %s643 = scalar_lea.vmem [#allocation2], 24
        %v644 = vld [vmem:[%s643] sm:$0xf]
        %v645 = vld [vmem:[%s643 + $0x4] sm:$0xf]
        %s646 = scalar_lea.vmem %s4, 3
        %v647 = vld [vmem:[%s646] sm:$0x1]
        %v649 = vlaneseq
        %v650 = vshrl.u32 %v649, 7
        %v651 = vsub.s32 0, %v650
        %v652 = vrot.slane %v647, %v651
        %v656 = vunpack.c.l.b16 %v644
        %v657 = vunpack.c.l.b16 %v645
        %v658 = vpack.c.b16 %v657, %v656
        %660 = vmatprep.subr.bf16.mxu0 0
        %661 = vmatpush1.bf16.msra.mxu0 0
        %662 = vmatprep.subr.bf16.mxu0 0
        %663 = vmatpush1.bf16.msra.mxu0 0
        %664 = vmatprep.subr.bf16.mxu0 0
        %665 = vmatpush1.bf16.msra.mxu0 0
        %666 = vmatprep.subr.bf16.mxu0 0
        %667 = vmatpush1.bf16.msra.mxu0 0
        %668 = vmatprep.subr.bf16.mxu0 0
        %669 = vmatpush1.bf16.msra.mxu0 0
        %670 = vmatprep.subr.bf16.mxu0 0
        %671 = vmatpush1.bf16.msra.mxu0 0
        %672 = vmatprep.subr.bf16.mxu0 0
        %673 = vmatpush1.bf16.msra.mxu0 0
        %674 = vmatprep.subr.bf16.mxu0 0
        %675 = vmatpush1.bf16.msra.mxu0 %v658
        %676 = vmatprep.subr.bf16.mxu0 0
        %677 = vmatpush2.bf16.msra.mxu0 0
        %678 = vmatprep.subr.bf16.mxu0 0
        %679 = vmatpush2.bf16.msra.mxu0 0
        %680 = vmatprep.subr.bf16.mxu0 0
        %681 = vmatpush2.bf16.msra.mxu0 0
        %682 = vmatprep.subr.bf16.mxu0 0
        %683 = vmatpush2.bf16.msra.mxu0 0
        %684 = vmatprep.subr.bf16.mxu0 0
        %685 = vmatpush2.bf16.msra.mxu0 0
        %686 = vmatprep.subr.bf16.mxu0 0
        %687 = vmatpush2.bf16.msra.mxu0 0
        %688 = vmatprep.subr.bf16.mxu0 0
        %689 = vmatpush2.bf16.msra.mxu0 0
        %690 = vmatprep.subr.bf16.mxu0 0
        %691 = vmatpush2.bf16.msra.mxu0 0
        %692 = vmatprep.mubr.bf16.mxu0 0
        %693 = vmatmul.mubr.bf16.gmra.mxu0 %v432
        %v694 = vpop.f32.mrf.mxu0
        %v695 = vadd.f32 %v652, %v694
        %v696 = vpop.f32.mrf.mxu0
        %v697 = vpop.f32.mrf.mxu0
        %v698 = vpop.f32.mrf.mxu0
        %699 = vdwg.mxu0
        %s700 = scalar_lea.vmem [#allocation2], 40
        %v701 = vld [vmem:[%s700] sm:$0xf]
        %v702 = vld [vmem:[%s700 + $0x4] sm:$0xf]
        %s703 = scalar_lea.vmem %s4, 5
        %v704 = vld [vmem:[%s703] sm:$0x1]
        %v706 = vlaneseq
        %v707 = vshrl.u32 %v706, 7
        %v708 = vsub.s32 0, %v707
        %v709 = vrot.slane %v704, %v708
        %v713 = vunpack.c.l.b16 %v701
        %v714 = vunpack.c.l.b16 %v702
        %v715 = vpack.c.b16 %v714, %v713
        %717 = vmatprep.subr.bf16.mxu0 0
        %718 = vmatpush1.bf16.msra.mxu0 0
        %719 = vmatprep.subr.bf16.mxu0 0
        %720 = vmatpush1.bf16.msra.mxu0 0
        %721 = vmatprep.subr.bf16.mxu0 0
        %722 = vmatpush1.bf16.msra.mxu0 0
        %723 = vmatprep.subr.bf16.mxu0 0
        %724 = vmatpush1.bf16.msra.mxu0 0
        %725 = vmatprep.subr.bf16.mxu0 0
        %726 = vmatpush1.bf16.msra.mxu0 0
        %727 = vmatprep.subr.bf16.mxu0 0
        %728 = vmatpush1.bf16.msra.mxu0 0
        %729 = vmatprep.subr.bf16.mxu0 0
        %730 = vmatpush1.bf16.msra.mxu0 0
        %731 = vmatprep.subr.bf16.mxu0 0
        %732 = vmatpush1.bf16.msra.mxu0 %v715
        %733 = vmatprep.subr.bf16.mxu0 0
        %734 = vmatpush2.bf16.msra.mxu0 0
        %735 = vmatprep.subr.bf16.mxu0 0
        %736 = vmatpush2.bf16.msra.mxu0 0
        %737 = vmatprep.subr.bf16.mxu0 0
        %738 = vmatpush2.bf16.msra.mxu0 0
        %739 = vmatprep.subr.bf16.mxu0 0
        %740 = vmatpush2.bf16.msra.mxu0 0
        %741 = vmatprep.subr.bf16.mxu0 0
        %742 = vmatpush2.bf16.msra.mxu0 0
        %743 = vmatprep.subr.bf16.mxu0 0
        %744 = vmatpush2.bf16.msra.mxu0 0
        %745 = vmatprep.subr.bf16.mxu0 0
        %746 = vmatpush2.bf16.msra.mxu0 0
        %747 = vmatprep.subr.bf16.mxu0 0
        %748 = vmatpush2.bf16.msra.mxu0 0
        %749 = vmatprep.mubr.bf16.mxu0 0
        %750 = vmatmul.mubr.bf16.gmra.mxu0 %v432
        %v751 = vpop.f32.mrf.mxu0
        %v752 = vadd.f32 %v709, %v751
        %v753 = vpop.f32.mrf.mxu0
        %v754 = vpop.f32.mrf.mxu0
        %v755 = vpop.f32.mrf.mxu0
        %756 = vdwg.mxu0
        %v757 = vpack.c.bf16 %v638, %v638
        %v758 = vpack.c.bf16 %v695, %v695
        %v760 = vsel %vm370, %v757, 0
        %v763 = vsel %vm370, %v758, 0
        %765 = vmatprep.subr.bf16.mxu0 0
        %766 = vmatpush1.bf16.xpose.msra.mxu0 0
        %767 = vmatprep.subr.bf16.mxu0 0
        %768 = vmatpush1.bf16.xpose.msra.mxu0 0
        %769 = vmatprep.subr.bf16.mxu0 0
        %770 = vmatpush1.bf16.xpose.msra.mxu0 0
        %771 = vmatprep.subr.bf16.mxu0 0
        %772 = vmatpush1.bf16.xpose.msra.mxu0 0
        %773 = vmatprep.subr.bf16.mxu0 0
        %774 = vmatpush1.bf16.xpose.msra.mxu0 0
        %775 = vmatprep.subr.bf16.mxu0 0
        %776 = vmatpush1.bf16.xpose.msra.mxu0 0
        %777 = vmatprep.subr.bf16.mxu0 0
        %778 = vmatpush1.bf16.xpose.msra.mxu0 0
        %779 = vmatprep.subr.bf16.mxu0 0
        %780 = vmatpush1.bf16.xpose.msra.mxu0 %v763
        %781 = vmatprep.subr.bf16.mxu0 0
        %782 = vmatpush2.bf16.xpose.msra.mxu0 0
        %783 = vmatprep.subr.bf16.mxu0 0
        %784 = vmatpush2.bf16.xpose.msra.mxu0 0
        %785 = vmatprep.subr.bf16.mxu0 0
        %786 = vmatpush2.bf16.xpose.msra.mxu0 0
        %787 = vmatprep.subr.bf16.mxu0 0
        %788 = vmatpush2.bf16.xpose.msra.mxu0 0
        %789 = vmatprep.subr.bf16.mxu0 0
        %790 = vmatpush2.bf16.xpose.msra.mxu0 0
        %791 = vmatprep.subr.bf16.mxu0 0
        %792 = vmatpush2.bf16.xpose.msra.mxu0 0
        %793 = vmatprep.subr.bf16.mxu0 0
        %794 = vmatpush2.bf16.xpose.msra.mxu0 0
        %795 = vmatprep.subr.bf16.mxu0 0
        %796 = vmatpush2.bf16.xpose.msra.mxu0 0
        %797 = vmatprep.mubr.bf16.mxu0 0
        %798 = vmatmul.mubr.bf16.gmra.mxu0 %v760
        %v799 = vpop.f32.mrf.mxu0
        %v800 = vadd.f32 0.0, %v799
        %v801 = vpop.f32.mrf.mxu0
        %v802 = vpop.f32.mrf.mxu0
        %v803 = vpop.f32.mrf.mxu0
        %804 = vdwg.mxu0
        %v805 = vmul.f32 %v800, %v583
        %v806 = vsub.f32 %v805, %v585
        %v807 = vmul.f32 %v806, 1.442695
        %v808 = vpow.pop %v807
        %v809 = vadd.f32 %v808, 1.0
        %v810 = vrcp.pop %v809
        %v811 = vsub.f32 1.0, %v810
        %v812 = vpack.c.bf16 %v810, %v810
        %v813 = vpack.c.bf16 %v526, %v526
        %vm814 = vcmask 39936
        %v816 = vsel %vm814, %v812, 0
        %vm818 = vcmask 1041408
        %vm819 = vcmask 1042432
        %v820 = vsel %vm818, 4294967295, 65535
        %v821 = vsel %vm819, %v820, 0
        %v823 = vand.u32 %v813, %v821
        %825 = vmatprep.subr.bf16.mxu0 0
        %826 = vmatpush1.bf16.msra.mxu0 0
        %827 = vmatprep.subr.bf16.mxu0 0
        %828 = vmatpush1.bf16.msra.mxu0 0
        %829 = vmatprep.subr.bf16.mxu0 0
        %830 = vmatpush1.bf16.msra.mxu0 0
        %831 = vmatprep.subr.bf16.mxu0 0
        %832 = vmatpush1.bf16.msra.mxu0 0
        %833 = vmatprep.subr.bf16.mxu0 0
        %834 = vmatpush1.bf16.msra.mxu0 0
        %835 = vmatprep.subr.bf16.mxu0 0
        %836 = vmatpush1.bf16.msra.mxu0 0
        %837 = vmatprep.subr.bf16.mxu0 0
        %838 = vmatpush1.bf16.msra.mxu0 0
        %839 = vmatprep.subr.bf16.mxu0 0
        %840 = vmatpush1.bf16.msra.mxu0 %v823
        %841 = vmatprep.subr.bf16.mxu0 0
        %842 = vmatpush2.bf16.msra.mxu0 0
        %843 = vmatprep.subr.bf16.mxu0 0
        %844 = vmatpush2.bf16.msra.mxu0 0
        %845 = vmatprep.subr.bf16.mxu0 0
        %846 = vmatpush2.bf16.msra.mxu0 0
        %847 = vmatprep.subr.bf16.mxu0 0
        %848 = vmatpush2.bf16.msra.mxu0 0
        %849 = vmatprep.subr.bf16.mxu0 0
        %850 = vmatpush2.bf16.msra.mxu0 0
        %851 = vmatprep.subr.bf16.mxu0 0
        %852 = vmatpush2.bf16.msra.mxu0 0
        %853 = vmatprep.subr.bf16.mxu0 0
        %854 = vmatpush2.bf16.msra.mxu0 0
        %855 = vmatprep.subr.bf16.mxu0 0
        %856 = vmatpush2.bf16.msra.mxu0 0
        %857 = vmatprep.mubr.bf16.mxu0 0
        %858 = vmatmul.mubr.bf16.gmra.mxu0 %v816
        %v859 = vpop.f32.mrf.mxu0
        %v860 = vadd.f32 0.0, %v859
        %v861 = vpop.f32.mrf.mxu0
        %v862 = vpop.f32.mrf.mxu0
        %v863 = vpop.f32.mrf.mxu0
        %864 = vdwg.mxu0
        %v865 = vpack.c.bf16 %v860, %v860
        %v866 = vld [vmem:[%s5] sm:$0xf]
        %v867 = vld [vmem:[%s5 + $0x4] sm:$0xf]
        %v868 = vpack.c.bf16 %v811, %v811
        %v869 = vpack.c.bf16 %v752, %v752
        %v871 = vsel %vm814, %v868, 0
        %v874 = vand.u32 %v869, %v821
        %876 = vmatprep.subr.bf16.mxu0 0
        %877 = vmatpush1.bf16.msra.mxu0 0
        %878 = vmatprep.subr.bf16.mxu0 0
        %879 = vmatpush1.bf16.msra.mxu0 0
        %880 = vmatprep.subr.bf16.mxu0 0
        %881 = vmatpush1.bf16.msra.mxu0 0
        %882 = vmatprep.subr.bf16.mxu0 0
        %883 = vmatpush1.bf16.msra.mxu0 0
        %884 = vmatprep.subr.bf16.mxu0 0
        %885 = vmatpush1.bf16.msra.mxu0 0
        %886 = vmatprep.subr.bf16.mxu0 0
        %887 = vmatpush1.bf16.msra.mxu0 0
        %888 = vmatprep.subr.bf16.mxu0 0
        %889 = vmatpush1.bf16.msra.mxu0 0
        %890 = vmatprep.subr.bf16.mxu0 0
        %891 = vmatpush1.bf16.msra.mxu0 %v874
        %892 = vmatprep.subr.bf16.mxu0 0
        %893 = vmatpush2.bf16.msra.mxu0 0
        %894 = vmatprep.subr.bf16.mxu0 0
        %895 = vmatpush2.bf16.msra.mxu0 0
        %896 = vmatprep.subr.bf16.mxu0 0
        %897 = vmatpush2.bf16.msra.mxu0 0
        %898 = vmatprep.subr.bf16.mxu0 0
        %899 = vmatpush2.bf16.msra.mxu0 0
        %900 = vmatprep.subr.bf16.mxu0 0
        %901 = vmatpush2.bf16.msra.mxu0 0
        %902 = vmatprep.subr.bf16.mxu0 0
        %903 = vmatpush2.bf16.msra.mxu0 0
        %904 = vmatprep.subr.bf16.mxu0 0
        %905 = vmatpush2.bf16.msra.mxu0 0
        %906 = vmatprep.subr.bf16.mxu0 0
        %907 = vmatpush2.bf16.msra.mxu0 0
        %908 = vmatprep.mubr.bf16.mxu0 0
        %909 = vmatmul.mubr.bf16.gmra.mxu0 %v871
        %v910 = vpop.f32.mrf.mxu0
        %v911 = vadd.f32 0.0, %v910
        %v912 = vpop.f32.mrf.mxu0
        %v913 = vpop.f32.mrf.mxu0
        %v914 = vpop.f32.mrf.mxu0
        %915 = vdwg.mxu0
        %v916 = vpack.c.bf16 %v911, %v911
        %s917 = scalar_lea.vmem %s5, 8
        %v918 = vld [vmem:[%s917] sm:$0xf]
        %v919 = vld [vmem:[%s917 + $0x4] sm:$0xf]
        %v922 = vunpack.c.l.b16 %v918
        %v923 = vunpack.c.l.b16 %v919
        %v924 = vpack.c.b16 %v923, %v922
        %v927 = vsel %vm370, %v916, 0
        %929 = vmatprep.subr.bf16.mxu0 0
        %930 = vmatpush1.bf16.msra.mxu0 0
        %931 = vmatprep.subr.bf16.mxu0 0
        %932 = vmatpush1.bf16.msra.mxu0 0
        %933 = vmatprep.subr.bf16.mxu0 0
        %934 = vmatpush1.bf16.msra.mxu0 0
        %935 = vmatprep.subr.bf16.mxu0 0
        %936 = vmatpush1.bf16.msra.mxu0 0
        %937 = vmatprep.subr.bf16.mxu0 0
        %938 = vmatpush1.bf16.msra.mxu0 0
        %939 = vmatprep.subr.bf16.mxu0 0
        %940 = vmatpush1.bf16.msra.mxu0 0
        %941 = vmatprep.subr.bf16.mxu0 0
        %942 = vmatpush1.bf16.msra.mxu0 0
        %943 = vmatprep.subr.bf16.mxu0 0
        %944 = vmatpush1.bf16.msra.mxu0 %v924
        %945 = vmatprep.subr.bf16.mxu0 0
        %946 = vmatpush2.bf16.msra.mxu0 0
        %947 = vmatprep.subr.bf16.mxu0 0
        %948 = vmatpush2.bf16.msra.mxu0 0
        %949 = vmatprep.subr.bf16.mxu0 0
        %950 = vmatpush2.bf16.msra.mxu0 0
        %951 = vmatprep.subr.bf16.mxu0 0
        %952 = vmatpush2.bf16.msra.mxu0 0
        %953 = vmatprep.subr.bf16.mxu0 0
        %954 = vmatpush2.bf16.msra.mxu0 0
        %955 = vmatprep.subr.bf16.mxu0 0
        %956 = vmatpush2.bf16.msra.mxu0 0
        %957 = vmatprep.subr.bf16.mxu0 0
        %958 = vmatpush2.bf16.msra.mxu0 0
        %959 = vmatprep.subr.bf16.mxu0 0
        %960 = vmatpush2.bf16.msra.mxu0 0
        %961 = vmatprep.mubr.bf16.mxu0 0
        %962 = vmatmul.mubr.bf16.gmra.mxu0 %v927
        %v963 = vpop.f32.mrf.mxu0
        %v964 = vadd.f32 0.0, %v963
        %v965 = vpop.f32.mrf.mxu0
        %v966 = vpop.f32.mrf.mxu0
        %v967 = vpop.f32.mrf.mxu0
        %968 = vdwg.mxu0
        %v971 = vunpack.c.l.b16 %v866
        %v972 = vunpack.c.l.b16 %v867
        %v973 = vpack.c.b16 %v972, %v971
        %v976 = vsel %vm370, %v865, 0
        %978 = vmatprep.subr.bf16.mxu0 0
        %979 = vmatpush1.bf16.msra.mxu0 0
        %980 = vmatprep.subr.bf16.mxu0 0
        %981 = vmatpush1.bf16.msra.mxu0 0
        %982 = vmatprep.subr.bf16.mxu0 0
        %983 = vmatpush1.bf16.msra.mxu0 0
        %984 = vmatprep.subr.bf16.mxu0 0
        %985 = vmatpush1.bf16.msra.mxu0 0
        %986 = vmatprep.subr.bf16.mxu0 0
        %987 = vmatpush1.bf16.msra.mxu0 0
        %988 = vmatprep.subr.bf16.mxu0 0
        %989 = vmatpush1.bf16.msra.mxu0 0
        %990 = vmatprep.subr.bf16.mxu0 0
        %991 = vmatpush1.bf16.msra.mxu0 0
        %992 = vmatprep.subr.bf16.mxu0 0
        %993 = vmatpush1.bf16.msra.mxu0 %v973
        %994 = vmatprep.subr.bf16.mxu0 0
        %995 = vmatpush2.bf16.msra.mxu0 0
        %996 = vmatprep.subr.bf16.mxu0 0
        %997 = vmatpush2.bf16.msra.mxu0 0
        %998 = vmatprep.subr.bf16.mxu0 0
        %999 = vmatpush2.bf16.msra.mxu0 0
        %1000 = vmatprep.subr.bf16.mxu0 0
        %1001 = vmatpush2.bf16.msra.mxu0 0
        %1002 = vmatprep.subr.bf16.mxu0 0
        %1003 = vmatpush2.bf16.msra.mxu0 0
        %1004 = vmatprep.subr.bf16.mxu0 0
        %1005 = vmatpush2.bf16.msra.mxu0 0
        %1006 = vmatprep.subr.bf16.mxu0 0
        %1007 = vmatpush2.bf16.msra.mxu0 0
        %1008 = vmatprep.subr.bf16.mxu0 0
        %1009 = vmatpush2.bf16.msra.mxu0 0
        %1010 = vmatprep.mubr.bf16.mxu0 0
        %1011 = vmatmul.mubr.bf16.gmra.mxu0 %v976
        %v1012 = vpop.f32.mrf.mxu0
        %v1013 = vadd.f32 %v964, %v1012
        %v1014 = vpop.f32.mrf.mxu0
        %v1015 = vpop.f32.mrf.mxu0
        %v1016 = vpop.f32.mrf.mxu0
        %1017 = vdwg.mxu0
        %v1018 = vld [vmem:[%s6] sm:$0x1]
        %v1020 = vlaneseq
        %v1021 = vshrl.u32 %v1020, 7
        %v1022 = vsub.s32 0, %v1021
        %v1023 = vrot.slane %v1018, %v1022
        %v1025 = vadd.f32 %v1013, %v1023
        %vm1026 = vcmask 126976
        %1027 = vst.msk [vmem:[%s350] sm:$0x1f] %vm1026, %v1025
        %p1028 = scmp.lt.s32.totalorder %s23, 1
        %s1029 = scalar_select %p1028, %s23, 1
        %p1030 = scmp.lt.s32.totalorder %s24, 0
        %s1031 = scalar_select %p1030, %s24, 0
        %s1032 = sadd.s32 %s1031, %s1029
        %s1033 = smul.addr %s1032, 8
        %s1034 = scalar_lea.vmem %s7, %s1033
        // Predicated region
        $region53: #{tpu_custom_call.1} parent=47 // pred_check
          %p1035 = pneg %p215
        $region54: #{tpu_custom_call.1} parent=47 // pred_check_branch
          %1037 = sbr.rel (%p1035) target = $region56
        $region55: #{tpu_custom_call.1} parent=47 // pred_region
          _
        $region56: #{tpu_custom_call.1} parent=47 // pred_fallthru
          _
      $region48: #{tpu_custom_call.1} parent=5 // pred_fallthru
        _
      %p1038 = scmp.le.s32.totalorder 2, %s14
      // Predicated region
      $region57: #{tpu_custom_call.1} parent=5 // pred_check
        %p1039 = pneg %p1038
      $region58: #{tpu_custom_call.1} parent=5 // pred_check_branch
        %1041 = sbr.rel (%p1039) target = $region60
      $region59: #{tpu_custom_call.1} parent=5 // pred_region
        %s1042 = ssub.s32 %s14, 2
        // Predicated region
        $region61: #{tpu_custom_call.1} parent=59 // pred_check
          %p1043 = pneg %p221
        $region62: #{tpu_custom_call.1} parent=59 // pred_check_branch
          %1045 = sbr.rel (%p1043) target = $region64
        $region63: #{tpu_custom_call.1} parent=59 // pred_region
          %p1046 = scmp.lt.s32.totalorder %s25, 1
          %s1047 = scalar_select %p1046, %s25, 1
          %p1048 = scmp.lt.s32.totalorder %s26, 0
          %s1049 = scalar_select %p1048, %s26, 0
          %s1050 = sadd.s32 %s1049, %s1047
          %s1051 = smul.addr %s1050, 8
          %s1052 = scalar_lea.vmem %s7, %s1051
        $region64: #{tpu_custom_call.1} parent=59 // pred_fallthru
          _
      $region60: #{tpu_custom_call.1} parent=5 // pred_fallthru
        _
    $region6: #{tpu_custom_call.1} parent=1 // loop_footer
      %s18 = sadd.s32 1, %s14
    $region7: #{tpu_custom_call.1} parent=1 // loop_footer_branch
      %13 = sbr.rel target = $region3
    $region8: #{tpu_custom_call.1} parent=1 // loop_exit
      _
    %1053 = vsyncpa [#allocation3], 1
    %s1054 = scalar_lea.sflag [#allocation3], 1
    %1055 = vsyncpa %s1054, 1

// kernel: tpu_custom_call.1
$region0: #{tpu_custom_call.1}
  #allocation0 [shape = 'u32[]', space=smem, size = 0x4, offset = 0x4, fixed_abs, tag = 'smem constant byte address 0x4 - core index']
  #allocation1 [shape = 'u32[144,128]{1,0:T(1,128)}', space=vmem, size = 0x12000, scoped, tag = 'internal scratch']
  %s0 = inlined_call_operand.vmem [shape: bf16[2,5,16], index: 0, kind: input, shape index: {}]
  %s1 = inlined_call_operand.vmem [shape: bf16[2,5,16], index: 1, kind: input, shape index: {}]
  %s2 = inlined_call_operand.vmem [shape: f32[2,1,5], index: 2, kind: input, shape index: {}]
  %s3 = inlined_call_operand.hbm [shape: bf16[6,16,16], index: 3, kind: input, shape index: {}]
  %s4 = inlined_call_operand.vmem [shape: f32[6,1,16], index: 4, kind: input, shape index: {}]
  %s5 = inlined_call_operand.vmem [shape: bf16[2,16,16], index: 5, kind: input, shape index: {}]
  %s6 = inlined_call_operand.vmem [shape: f32[1,16], index: 6, kind: input, shape index: {}]
  %s7 = inlined_call_operand.vmem [shape: f32[2,5,16], index: 7, kind: output, shape index: {}]
  %s8 = sld [smem:[#allocation0]]
  $region65: #{tpu_custom_call.1} parent=0
    _
  %s10 = ssub.s32 1, %s8
  %s11 = scalar_select 0, %s10, %s8
  $region1: #{tpu_custom_call.1} parent=0
    #allocation2 [shape = 'u8[24576]{0}', space=vmem, size = 0x6000, scoped, tag = 'input window, operand 3, single buffered']
    #allocation3 [shape = 's32[2]{0}', space=sflag, size = 0x8, scoped, tag = 'scoped memory for tpu_custom_call.1']
    %12 = vsyncpa [#allocation3], 0
    loop: start=0, step=1, limit=4
    $region2: #{tpu_custom_call.1} parent=1 // loop_pre_header
      _
    $region3: #{tpu_custom_call.1} parent=1 // loop_header
      %s14 = sphi 0, %s18
      %p15 = scmp.ge.s32.totalorder %s14, 4
      %s21 = sphi 0, %s33
      %s22 = sphi 0, %s29
      %s23 = sphi 0, %s21
      %s24 = sphi 0, %s22
      %s25 = sphi 0, %s23
      %s26 = sphi 0, %s24
      %s38 = sphi 0, %s40
      %s41 = sphi 0, %s38
      %s42 = sphi 0, %s41
      %s58 = sphi 0, %s42
      %s64 = sphi 0, %s66
      %s67 = sphi 0, %s64
      %s68 = sphi 0, %s67
      %s84 = sphi 0, %s68
      %s90 = sphi 0, %s92
      %s93 = sphi 0, %s90
      %s94 = sphi 0, %s93
      %s110 = sphi 0, %s94
      %s114 = sphi 0, %s114
      %s116 = sphi 0, %s114
      %s117 = sphi 0, %s116
      %s131 = sphi 0, %s117
      %s135 = sphi 0, %s135
      %s137 = sphi 0, %s135
      %s138 = sphi 0, %s137
      %s152 = sphi 0, %s138
      %s156 = sphi 0, %s156
      %s158 = sphi 0, %s156
      %s159 = sphi 0, %s158
      %s173 = sphi 0, %s159
      %s177 = sphi 0, %s177
      %s179 = sphi 0, %s177
      %s180 = sphi 0, %s179
      %s194 = sphi 0, %s180
      %s202 = sphi 0, %s204
      %s205 = sphi 0, %s202
      %s206 = sphi 0, %s205
      %s222 = sphi 0, %s206
    $region4: #{tpu_custom_call.1} parent=1 // loop_header_branch
      %17 = sbr.rel (%p15) target = $region8
    $region5: #{tpu_custom_call.1} parent=1 // loop_body
      %s19 = ssub.s32 %s14, 1
      %s20 = ssub.s32 %s14, 2
      %s27 = sadd.s32 1, %s22
      %p28 = scmp.ge.s32.totalorder %s27, 1
      %s29 = scalar_select %p28, 0, %s27
      %s30 = sadd.s32 1, %s21
      %s31 = scalar_select %p28, %s30, %s21
      %p32 = scmp.ge.s32.totalorder %s31, 2
      %s33 = scalar_select %p32, 0, %s31
      %s34 = ssub.s32 %s21, %s33
      %s35 = ssub.s32 %s22, %s29
      %s36 = sor.u32 %s34, %s35
      %p37 = scmp.eq.s32.totalorder %s36, 0
      %s39 = sadd.s32 %s38, 1
      %s40 = scalar_select %p37, %s38, %s39
      %p43 = pneg %p37
      %p44 = scmp.eq.s32.totalorder %s14, 1
      %p45 = por %p43, %p44
      %p46 = scmp.ne.s32.totalorder %s38, %s41
      %p47 = scmp.eq.s32.totalorder %s14, 0
      %p48 = por %p46, %p47
      %p49 = scmp.ne.s32.totalorder %s38, %s41
      %p50 = scmp.eq.s32.totalorder %s19, 1
      %p51 = por %p49, %p50
      %p52 = scmp.ne.s32.totalorder %s41, %s42
      %p53 = scmp.eq.s32.totalorder %s19, 0
      %p54 = por %p52, %p53
      %p55 = scmp.ne.s32.totalorder %s41, %s42
      %p56 = scmp.eq.s32.totalorder %s20, 1
      %p57 = por %p55, %p56
      %p59 = scmp.ne.s32.totalorder %s42, %s58
      %p60 = scmp.eq.s32.totalorder %s20, 0
      %p61 = por %p59, %p60
      %s62 = ssub.s32 %s21, %s33
      %p63 = scmp.eq.s32.totalorder %s62, 0
      %s65 = sadd.s32 %s64, 1
      %s66 = scalar_select %p63, %s64, %s65
      %p69 = pneg %p63
      %p70 = scmp.eq.s32.totalorder %s14, 1
      %p71 = por %p69, %p70
      %p72 = scmp.ne.s32.totalorder %s64, %s67
      %p73 = scmp.eq.s32.totalorder %s14, 0
      %p74 = por %p72, %p73
      %p75 = scmp.ne.s32.totalorder %s64, %s67
      %p76 = scmp.eq.s32.totalorder %s19, 1
      %p77 = por %p75, %p76
      %p78 = scmp.ne.s32.totalorder %s67, %s68
      %p79 = scmp.eq.s32.totalorder %s19, 0
      %p80 = por %p78, %p79
      %p81 = scmp.ne.s32.totalorder %s67, %s68
      %p82 = scmp.eq.s32.totalorder %s20, 1
      %p83 = por %p81, %p82
      %p85 = scmp.ne.s32.totalorder %s68, %s84
      %p86 = scmp.eq.s32.totalorder %s20, 0
      %p87 = por %p85, %p86
      %s88 = ssub.s32 %s21, %s33
      %p89 = scmp.eq.s32.totalorder %s88, 0
      %s91 = sadd.s32 %s90, 1
      %s92 = scalar_select %p89, %s90, %s91
      %p95 = pneg %p89
      %p96 = scmp.eq.s32.totalorder %s14, 1
      %p97 = por %p95, %p96
      %p98 = scmp.ne.s32.totalorder %s90, %s93
      %p99 = scmp.eq.s32.totalorder %s14, 0
      %p100 = por %p98, %p99
      %p101 = scmp.ne.s32.totalorder %s90, %s93
      %p102 = scmp.eq.s32.totalorder %s19, 1
      %p103 = por %p101, %p102
      %p104 = scmp.ne.s32.totalorder %s93, %s94
      %p105 = scmp.eq.s32.totalorder %s19, 0
      %p106 = por %p104, %p105
      %p107 = scmp.ne.s32.totalorder %s93, %s94
      %p108 = scmp.eq.s32.totalorder %s20, 1
      %p109 = por %p107, %p108
      %p111 = scmp.ne.s32.totalorder %s94, %s110
      %p112 = scmp.eq.s32.totalorder %s20, 0
      %p113 = por %p111, %p112
      %s115 = sadd.s32 %s114, 1
      %p118 = scmp.eq.s32.totalorder %s14, 1
      %p119 = scmp.ne.s32.totalorder %s114, %s116
      %p120 = scmp.eq.s32.totalorder %s14, 0
      %p121 = por %p119, %p120
      %p122 = scmp.ne.s32.totalorder %s114, %s116
      %p123 = scmp.eq.s32.totalorder %s19, 1
      %p124 = por %p122, %p123
      %p125 = scmp.ne.s32.totalorder %s116, %s117
      %p126 = scmp.eq.s32.totalorder %s19, 0
      %p127 = por %p125, %p126
      %p128 = scmp.ne.s32.totalorder %s116, %s117
      %p129 = scmp.eq.s32.totalorder %s20, 1
      %p130 = por %p128, %p129
      %p132 = scmp.ne.s32.totalorder %s117, %s131
      %p133 = scmp.eq.s32.totalorder %s20, 0
      %p134 = por %p132, %p133
      %s136 = sadd.s32 %s135, 1
      %p139 = scmp.eq.s32.totalorder %s14, 1
      %p140 = scmp.ne.s32.totalorder %s135, %s137
      %p141 = scmp.eq.s32.totalorder %s14, 0
      %p142 = por %p140, %p141
      %p143 = scmp.ne.s32.totalorder %s135, %s137
      %p144 = scmp.eq.s32.totalorder %s19, 1
      %p145 = por %p143, %p144
      %p146 = scmp.ne.s32.totalorder %s137, %s138
      %p147 = scmp.eq.s32.totalorder %s19, 0
      %p148 = por %p146, %p147
      %p149 = scmp.ne.s32.totalorder %s137, %s138
      %p150 = scmp.eq.s32.totalorder %s20, 1
      %p151 = por %p149, %p150
      %p153 = scmp.ne.s32.totalorder %s138, %s152
      %p154 = scmp.eq.s32.totalorder %s20, 0
      %p155 = por %p153, %p154
      %s157 = sadd.s32 %s156, 1
      %p160 = scmp.eq.s32.totalorder %s14, 1
      %p161 = scmp.ne.s32.totalorder %s156, %s158
      %p162 = scmp.eq.s32.totalorder %s14, 0
      %p163 = por %p161, %p162
      %p164 = scmp.ne.s32.totalorder %s156, %s158
      %p165 = scmp.eq.s32.totalorder %s19, 1
      %p166 = por %p164, %p165
      %p167 = scmp.ne.s32.totalorder %s158, %s159
      %p168 = scmp.eq.s32.totalorder %s19, 0
      %p169 = por %p167, %p168
      %p170 = scmp.ne.s32.totalorder %s158, %s159
      %p171 = scmp.eq.s32.totalorder %s20, 1
      %p172 = por %p170, %p171
      %p174 = scmp.ne.s32.totalorder %s159, %s173
      %p175 = scmp.eq.s32.totalorder %s20, 0
      %p176 = por %p174, %p175
      %s178 = sadd.s32 %s177, 1
      %p181 = scmp.eq.s32.totalorder %s14, 1
      %p182 = scmp.ne.s32.totalorder %s177, %s179
      %p183 = scmp.eq.s32.totalorder %s14, 0
      %p184 = por %p182, %p183
      %p185 = scmp.ne.s32.totalorder %s177, %s179
      %p186 = scmp.eq.s32.totalorder %s19, 1
      %p187 = por %p185, %p186
      %p188 = scmp.ne.s32.totalorder %s179, %s180
      %p189 = scmp.eq.s32.totalorder %s19, 0
      %p190 = por %p188, %p189
      %p191 = scmp.ne.s32.totalorder %s179, %s180
      %p192 = scmp.eq.s32.totalorder %s20, 1
      %p193 = por %p191, %p192
      %p195 = scmp.ne.s32.totalorder %s180, %s194
      %p196 = scmp.eq.s32.totalorder %s20, 0
      %p197 = por %p195, %p196
      %s198 = ssub.s32 %s21, %s33
      %s199 = ssub.s32 %s22, %s29
      %s200 = sor.u32 %s198, %s199
      %p201 = scmp.eq.s32.totalorder %s200, 0
      %s203 = sadd.s32 %s202, 1
      %s204 = scalar_select %p201, %s202, %s203
      %p207 = pneg %p201
      %p208 = scmp.eq.s32.totalorder %s14, 1
      %p209 = por %p207, %p208
      %p210 = scmp.ne.s32.totalorder %s202, %s205
      %p211 = scmp.eq.s32.totalorder %s14, 0
      %p212 = por %p210, %p211
      %p213 = scmp.ne.s32.totalorder %s202, %s205
      %p214 = scmp.eq.s32.totalorder %s19, 1
      %p215 = por %p213, %p214
      %p216 = scmp.ne.s32.totalorder %s205, %s206
      %p217 = scmp.eq.s32.totalorder %s19, 0
      %p218 = por %p216, %p217
      %p219 = scmp.ne.s32.totalorder %s205, %s206
      %p220 = scmp.eq.s32.totalorder %s20, 1
      %p221 = por %p219, %p220
      %p223 = scmp.ne.s32.totalorder %s206, %s222
      %p224 = scmp.eq.s32.totalorder %s20, 0
      %p225 = por %p223, %p224
      %p226 = scmp.le.s32.totalorder 1, %s14
      %p227 = scmp.lt.s32.totalorder %s14, 3
      %p228 = pnand %p226, %p227
      %p229 = pneg %p228
      // Predicated region
      $region9: #{tpu_custom_call.1} parent=5 // pred_check
        _
      $region10: #{tpu_custom_call.1} parent=5 // pred_check_branch
        %231 = sbr.rel (%p228) target = $region12
      $region11: #{tpu_custom_call.1} parent=5 // pred_region
        %s232 = ssub.s32 %s14, 1
        // Predicated region
        $region13: #{tpu_custom_call.1} parent=11 // pred_check
          %p233 = pneg %p127
        $region14: #{tpu_custom_call.1} parent=11 // pred_check_branch
          %235 = sbr.rel (%p233) target = $region16
        $region15: #{tpu_custom_call.1} parent=11 // pred_region
          %s237 = ssub.s32 768, 768
          %238 = vsyncadd [#allocation3], %s237
          %s239 = sshll.u32 [#allocation2], 4
          %s240 = int_to_ptr.vmem [resolvable:$true] %s239
          %245 = dma.hbm_to_vmem [thread:$0]  %s3, 768, %s240, [#allocation3], 64, 64, 4
        $region16: #{tpu_custom_call.1} parent=11 // pred_fallthru
          _
        // Predicated region
        $region17: #{tpu_custom_call.1} parent=11 // pred_check
          %p246 = pneg %p148
        $region18: #{tpu_custom_call.1} parent=11 // pred_check_branch
          %248 = sbr.rel (%p246) target = $region20
        $region19: #{tpu_custom_call.1} parent=11 // pred_region
          _
        $region20: #{tpu_custom_call.1} parent=11 // pred_fallthru
          _
        // Predicated region
        $region21: #{tpu_custom_call.1} parent=11 // pred_check
          %p249 = pneg %p169
        $region22: #{tpu_custom_call.1} parent=11 // pred_check_branch
          %251 = sbr.rel (%p249) target = $region24
        $region23: #{tpu_custom_call.1} parent=11 // pred_region
          _
        $region24: #{tpu_custom_call.1} parent=11 // pred_fallthru
          _
        // Predicated region
        $region25: #{tpu_custom_call.1} parent=11 // pred_check
          %p252 = pneg %p190
        $region26: #{tpu_custom_call.1} parent=11 // pred_check_branch
          %254 = sbr.rel (%p252) target = $region28
        $region27: #{tpu_custom_call.1} parent=11 // pred_region
          _
        $region28: #{tpu_custom_call.1} parent=11 // pred_fallthru
          _
      $region12: #{tpu_custom_call.1} parent=5 // pred_fallthru
        _
      %p255 = scmp.lt.s32.totalorder %s14, 2
      // Predicated region
      $region29: #{tpu_custom_call.1} parent=5 // pred_check
        %p256 = pneg %p255
      $region30: #{tpu_custom_call.1} parent=5 // pred_check_branch
        %258 = sbr.rel (%p256) target = $region32
      $region31: #{tpu_custom_call.1} parent=5 // pred_region
        // Predicated region
        $region33: #{tpu_custom_call.1} parent=31 // pred_check
          %p259 = pneg %p48
        $region34: #{tpu_custom_call.1} parent=31 // pred_check_branch
          %261 = sbr.rel (%p259) target = $region36
        $region35: #{tpu_custom_call.1} parent=31 // pred_region
          %p262 = scmp.lt.s32.totalorder %s21, 1
          %s263 = scalar_select %p262, %s21, 1
          %p264 = scmp.lt.s32.totalorder %s22, 0
          %s265 = scalar_select %p264, %s22, 0
          %s266 = sadd.s32 %s265, %s263
          %s267 = smul.addr %s266, 4
          %s268 = scalar_lea.vmem %s0, %s267
        $region36: #{tpu_custom_call.1} parent=31 // pred_fallthru
          _
        // Predicated region
        $region37: #{tpu_custom_call.1} parent=31 // pred_check
          %p269 = pneg %p74
        $region38: #{tpu_custom_call.1} parent=31 // pred_check_branch
          %271 = sbr.rel (%p269) target = $region40
        $region39: #{tpu_custom_call.1} parent=31 // pred_region
          %p272 = scmp.lt.s32.totalorder %s21, 1
          %s273 = scalar_select %p272, %s21, 1
          %s274 = smul.addr %s273, 4
          %s275 = scalar_lea.vmem %s1, %s274
        $region40: #{tpu_custom_call.1} parent=31 // pred_fallthru
          _
        // Predicated region
        $region41: #{tpu_custom_call.1} parent=31 // pred_check
          %p276 = pneg %p100
        $region42: #{tpu_custom_call.1} parent=31 // pred_check_branch
          %278 = sbr.rel (%p276) target = $region44
        $region43: #{tpu_custom_call.1} parent=31 // pred_region
          %p279 = scmp.lt.s32.totalorder %s21, 1
          %s280 = scalar_select %p279, %s21, 1
          %s281 = scalar_lea.vmem %s2, %s280
        $region44: #{tpu_custom_call.1} parent=31 // pred_fallthru
          _
      $region32: #{tpu_custom_call.1} parent=5 // pred_fallthru
        _
      %p282 = scmp.le.s32.totalorder 1, %s14
      %p283 = scmp.lt.s32.totalorder %s14, 3
      %p284 = pnand %p282, %p283
      %p285 = pneg %p284
      // Predicated region
      $region45: #{tpu_custom_call.1} parent=5 // pred_check
        _
      $region46: #{tpu_custom_call.1} parent=5 // pred_check_branch
        %287 = sbr.rel (%p284) target = $region48
      $region47: #{tpu_custom_call.1} parent=5 // pred_region
        %s288 = ssub.s32 %s14, 1
        // Predicated region
        $region49: #{tpu_custom_call.1} parent=47 // pred_check
          %p289 = pneg %p127
        $region50: #{tpu_custom_call.1} parent=47 // pred_check_branch
          %291 = sbr.rel (%p289) target = $region52
        $region51: #{tpu_custom_call.1} parent=47 // pred_region
          %292 = dma.done [#allocation3], 768
        $region52: #{tpu_custom_call.1} parent=47 // pred_fallthru
          _
        %p293 = scmp.lt.s32.totalorder %s23, 1
        %s294 = scalar_select %p293, %s23, 1
        %p295 = scmp.lt.s32.totalorder %s24, 0
        %s296 = scalar_select %p295, %s24, 0
        %s297 = sadd.s32 %s296, %s294
        %s298 = smul.addr %s297, 4
        %s299 = scalar_lea.vmem %s0, %s298
        %p300 = pneg %p54
        %p301 = pneg %p51
        %p302 = scmp.lt.s32.totalorder %s23, 1
        %s303 = scalar_select %p302, %s23, 1
        %s304 = smul.addr %s303, 4
        %s305 = scalar_lea.vmem %s1, %s304
        %p306 = pneg %p80
        %p307 = pneg %p77
        %p308 = scmp.lt.s32.totalorder %s23, 1
        %s309 = scalar_select %p308, %s23, 1
        %s310 = scalar_lea.vmem %s2, %s309
        %p311 = pneg %p106
        %p312 = pneg %p103
        %p313 = pneg %p127
        %p314 = pneg %p124
        %p315 = pneg %p148
        %p316 = pneg %p145
        %p317 = pneg %p169
        %p318 = pneg %p166
        %p319 = pneg %p190
        %p320 = pneg %p187
        %p321 = pneg %p218
        %p322 = pneg %p215
        %p323 = scmp.lt.s32.totalorder %s23, 1
        %s324 = scalar_select %p323, %s23, 1
        %p325 = scmp.lt.s32.totalorder %s24, 0
        %s326 = scalar_select %p325, %s24, 0
        %s327 = sadd.s32 %s326, %s324
        %s328 = smul.addr %s327, 8
        %s329 = scalar_lea.vmem %s7, %s328
        %p330 = scmp.lt.s32.totalorder %s23, 1
        %s331 = scalar_select %p330, %s23, 1
        %p332 = scmp.lt.s32.totalorder %s24, 0
        %s333 = scalar_select %p332, %s24, 0
        %s334 = sadd.s32 %s333, %s331
        %s335 = smul.addr %s334, 4
        %s336 = scalar_lea.vmem %s0, %s335
        %p337 = scmp.lt.s32.totalorder %s23, 1
        %s338 = scalar_select %p337, %s23, 1
        %s339 = smul.addr %s338, 4
        %s340 = scalar_lea.vmem %s1, %s339
        %p341 = scmp.lt.s32.totalorder %s23, 1
        %s342 = scalar_select %p341, %s23, 1
        %s343 = scalar_lea.vmem %s2, %s342
        %p344 = scmp.lt.s32.totalorder %s23, 1
        %s345 = scalar_select %p344, %s23, 1
        %p346 = scmp.lt.s32.totalorder %s24, 0
        %s347 = scalar_select %p346, %s24, 0
        %s348 = sadd.s32 %s347, %s345
        %s349 = smul.addr %s348, 8
        %s350 = scalar_lea.vmem %s7, %s349
        %v352 = vld [vmem:[%s336] sm:$0x7]
        %v353 = vld [vmem:[%s340] sm:$0x7]
        %v354 = vld [vmem:[%s343] sm:$0x1]
        %v355 = vld [vmem:[#allocation2] sm:$0xf]
        %v356 = vld [vmem:[#allocation2 + $0x4] sm:$0xf]
        %v357 = vld [vmem:[%s4] sm:$0x1]
        %v359 = vlaneseq
        %v360 = vshrl.u32 %v359, 7
        %v361 = vsub.s32 0, %v360
        %v362 = vrot.slane %v357, %v361
        %v366 = vunpack.c.l.b16 %v355
        %v367 = vunpack.c.l.b16 %v356
        %v368 = vpack.c.b16 %v367, %v366
        %vm370 = vcmask 130048
        %v372 = vsel %vm370, %v352, 0
        %374 = vmatprep.subr.bf16.mxu0 0
        %375 = vmatpush1.bf16.msra.mxu0 0
        %376 = vmatprep.subr.bf16.mxu0 0
        %377 = vmatpush1.bf16.msra.mxu0 0
        %378 = vmatprep.subr.bf16.mxu0 0
        %379 = vmatpush1.bf16.msra.mxu0 0
        %380 = vmatprep.subr.bf16.mxu0 0
        %381 = vmatpush1.bf16.msra.mxu0 0
        %382 = vmatprep.subr.bf16.mxu0 0
        %383 = vmatpush1.bf16.msra.mxu0 0
        %384 = vmatprep.subr.bf16.mxu0 0
        %385 = vmatpush1.bf16.msra.mxu0 0
        %386 = vmatprep.subr.bf16.mxu0 0
        %387 = vmatpush1.bf16.msra.mxu0 0
        %388 = vmatprep.subr.bf16.mxu0 0
        %389 = vmatpush1.bf16.msra.mxu0 %v368
        %390 = vmatprep.subr.bf16.mxu0 0
        %391 = vmatpush2.bf16.msra.mxu0 0
        %392 = vmatprep.subr.bf16.mxu0 0
        %393 = vmatpush2.bf16.msra.mxu0 0
        %394 = vmatprep.subr.bf16.mxu0 0
        %395 = vmatpush2.bf16.msra.mxu0 0
        %396 = vmatprep.subr.bf16.mxu0 0
        %397 = vmatpush2.bf16.msra.mxu0 0
        %398 = vmatprep.subr.bf16.mxu0 0
        %399 = vmatpush2.bf16.msra.mxu0 0
        %400 = vmatprep.subr.bf16.mxu0 0
        %401 = vmatpush2.bf16.msra.mxu0 0
        %402 = vmatprep.subr.bf16.mxu0 0
        %403 = vmatpush2.bf16.msra.mxu0 0
        %404 = vmatprep.subr.bf16.mxu0 0
        %405 = vmatpush2.bf16.msra.mxu0 0
        %406 = vmatprep.mubr.bf16.mxu0 0
        %407 = vmatmul.mubr.bf16.gmra.mxu0 %v372
        %v408 = vpop.f32.mrf.mxu0
        %v409 = vadd.f32 %v362, %v408
        %v410 = vpop.f32.mrf.mxu0
        %v411 = vpop.f32.mrf.mxu0
        %v412 = vpop.f32.mrf.mxu0
        %413 = vdwg.mxu0
        %s414 = scalar_lea.vmem [#allocation2], 16
        %v415 = vld [vmem:[%s414] sm:$0xf]
        %v416 = vld [vmem:[%s414 + $0x4] sm:$0xf]
        %s417 = scalar_lea.vmem %s4, 2
        %v418 = vld [vmem:[%s417] sm:$0x1]
        %v420 = vlaneseq
        %v421 = vshrl.u32 %v420, 7
        %v422 = vsub.s32 0, %v421
        %v423 = vrot.slane %v418, %v422
        %v427 = vunpack.c.l.b16 %v415
        %v428 = vunpack.c.l.b16 %v416
        %v429 = vpack.c.b16 %v428, %v427
        %v432 = vsel %vm370, %v353, 0
        %434 = vmatprep.subr.bf16.mxu0 0
        %435 = vmatpush1.bf16.msra.mxu0 0
        %436 = vmatprep.subr.bf16.mxu0 0
        %437 = vmatpush1.bf16.msra.mxu0 0
        %438 = vmatprep.subr.bf16.mxu0 0
        %439 = vmatpush1.bf16.msra.mxu0 0
        %440 = vmatprep.subr.bf16.mxu0 0
        %441 = vmatpush1.bf16.msra.mxu0 0
        %442 = vmatprep.subr.bf16.mxu0 0
        %443 = vmatpush1.bf16.msra.mxu0 0
        %444 = vmatprep.subr.bf16.mxu0 0
        %445 = vmatpush1.bf16.msra.mxu0 0
        %446 = vmatprep.subr.bf16.mxu0 0
        %447 = vmatpush1.bf16.msra.mxu0 0
        %448 = vmatprep.subr.bf16.mxu0 0
        %449 = vmatpush1.bf16.msra.mxu0 %v429
        %450 = vmatprep.subr.bf16.mxu0 0
        %451 = vmatpush2.bf16.msra.mxu0 0
        %452 = vmatprep.subr.bf16.mxu0 0
        %453 = vmatpush2.bf16.msra.mxu0 0
        %454 = vmatprep.subr.bf16.mxu0 0
        %455 = vmatpush2.bf16.msra.mxu0 0
        %456 = vmatprep.subr.bf16.mxu0 0
        %457 = vmatpush2.bf16.msra.mxu0 0
        %458 = vmatprep.subr.bf16.mxu0 0
        %459 = vmatpush2.bf16.msra.mxu0 0
        %460 = vmatprep.subr.bf16.mxu0 0
        %461 = vmatpush2.bf16.msra.mxu0 0
        %462 = vmatprep.subr.bf16.mxu0 0
        %463 = vmatpush2.bf16.msra.mxu0 0
        %464 = vmatprep.subr.bf16.mxu0 0
        %465 = vmatpush2.bf16.msra.mxu0 0
        %466 = vmatprep.mubr.bf16.mxu0 0
        %467 = vmatmul.mubr.bf16.gmra.mxu0 %v432
        %v468 = vpop.f32.mrf.mxu0
        %v469 = vadd.f32 %v423, %v468
        %v470 = vpop.f32.mrf.mxu0
        %v471 = vpop.f32.mrf.mxu0
        %v472 = vpop.f32.mrf.mxu0
        %473 = vdwg.mxu0
        %s474 = scalar_lea.vmem [#allocation2], 32
        %v475 = vld [vmem:[%s474] sm:$0xf]
        %v476 = vld [vmem:[%s474 + $0x4] sm:$0xf]
        %s477 = scalar_lea.vmem %s4, 4
        %v478 = vld [vmem:[%s477] sm:$0x1]
        %v480 = vlaneseq
        %v481 = vshrl.u32 %v480, 7
        %v482 = vsub.s32 0, %v481
        %v483 = vrot.slane %v478, %v482
        %v487 = vunpack.c.l.b16 %v475
        %v488 = vunpack.c.l.b16 %v476
        %v489 = vpack.c.b16 %v488, %v487
        %491 = vmatprep.subr.bf16.mxu0 0
        %492 = vmatpush1.bf16.msra.mxu0 0
        %493 = vmatprep.subr.bf16.mxu0 0
        %494 = vmatpush1.bf16.msra.mxu0 0
        %495 = vmatprep.subr.bf16.mxu0 0
        %496 = vmatpush1.bf16.msra.mxu0 0
        %497 = vmatprep.subr.bf16.mxu0 0
        %498 = vmatpush1.bf16.msra.mxu0 0
        %499 = vmatprep.subr.bf16.mxu0 0
        %500 = vmatpush1.bf16.msra.mxu0 0
        %501 = vmatprep.subr.bf16.mxu0 0
        %502 = vmatpush1.bf16.msra.mxu0 0
        %503 = vmatprep.subr.bf16.mxu0 0
        %504 = vmatpush1.bf16.msra.mxu0 0
        %505 = vmatprep.subr.bf16.mxu0 0
        %506 = vmatpush1.bf16.msra.mxu0 %v489
        %507 = vmatprep.subr.bf16.mxu0 0
        %508 = vmatpush2.bf16.msra.mxu0 0
        %509 = vmatprep.subr.bf16.mxu0 0
        %510 = vmatpush2.bf16.msra.mxu0 0
        %511 = vmatprep.subr.bf16.mxu0 0
        %512 = vmatpush2.bf16.msra.mxu0 0
        %513 = vmatprep.subr.bf16.mxu0 0
        %514 = vmatpush2.bf16.msra.mxu0 0
        %515 = vmatprep.subr.bf16.mxu0 0
        %516 = vmatpush2.bf16.msra.mxu0 0
        %517 = vmatprep.subr.bf16.mxu0 0
        %518 = vmatpush2.bf16.msra.mxu0 0
        %519 = vmatprep.subr.bf16.mxu0 0
        %520 = vmatpush2.bf16.msra.mxu0 0
        %521 = vmatprep.subr.bf16.mxu0 0
        %522 = vmatpush2.bf16.msra.mxu0 0
        %523 = vmatprep.mubr.bf16.mxu0 0
        %524 = vmatmul.mubr.bf16.gmra.mxu0 %v432
        %v525 = vpop.f32.mrf.mxu0
        %v526 = vadd.f32 %v483, %v525
        %v527 = vpop.f32.mrf.mxu0
        %v528 = vpop.f32.mrf.mxu0
        %v529 = vpop.f32.mrf.mxu0
        %530 = vdwg.mxu0
        %v531 = vpack.c.bf16 %v409, %v409
        %v532 = vpack.c.bf16 %v469, %v469
        %v534 = vsel %vm370, %v531, 0
        %v537 = vsel %vm370, %v532, 0
        %539 = vmatprep.subr.bf16.mxu0 0
        %540 = vmatpush1.bf16.xpose.msra.mxu0 0
        %541 = vmatprep.subr.bf16.mxu0 0
        %542 = vmatpush1.bf16.xpose.msra.mxu0 0
        %543 = vmatprep.subr.bf16.mxu0 0
        %544 = vmatpush1.bf16.xpose.msra.mxu0 0
        %545 = vmatprep.subr.bf16.mxu0 0
        %546 = vmatpush1.bf16.xpose.msra.mxu0 0
        %547 = vmatprep.subr.bf16.mxu0 0
        %548 = vmatpush1.bf16.xpose.msra.mxu0 0
        %549 = vmatprep.subr.bf16.mxu0 0
        %550 = vmatpush1.bf16.xpose.msra.mxu0 0
        %551 = vmatprep.subr.bf16.mxu0 0
        %552 = vmatpush1.bf16.xpose.msra.mxu0 0
        %553 = vmatprep.subr.bf16.mxu0 0
        %554 = vmatpush1.bf16.xpose.msra.mxu0 %v537
        %555 = vmatprep.subr.bf16.mxu0 0
        %556 = vmatpush2.bf16.xpose.msra.mxu0 0
        %557 = vmatprep.subr.bf16.mxu0 0
        %558 = vmatpush2.bf16.xpose.msra.mxu0 0
        %559 = vmatprep.subr.bf16.mxu0 0
        %560 = vmatpush2.bf16.xpose.msra.mxu0 0
        %561 = vmatprep.subr.bf16.mxu0 0
        %562 = vmatpush2.bf16.xpose.msra.mxu0 0
        %563 = vmatprep.subr.bf16.mxu0 0
        %564 = vmatpush2.bf16.xpose.msra.mxu0 0
        %565 = vmatprep.subr.bf16.mxu0 0
        %566 = vmatpush2.bf16.xpose.msra.mxu0 0
        %567 = vmatprep.subr.bf16.mxu0 0
        %568 = vmatpush2.bf16.xpose.msra.mxu0 0
        %569 = vmatprep.subr.bf16.mxu0 0
        %570 = vmatpush2.bf16.xpose.msra.mxu0 0
        %571 = vmatprep.mubr.bf16.mxu0 0
        %572 = vmatmul.mubr.bf16.gmra.mxu0 %v534
        %v573 = vpop.f32.mrf.mxu0
        %v574 = vadd.f32 0.0, %v573
        %v575 = vpop.f32.mrf.mxu0
        %v576 = vpop.f32.mrf.mxu0
        %v577 = vpop.f32.mrf.mxu0
        %578 = vdwg.mxu0
        %v580 = vlaneseq
        %v581 = vshrl.u32 %v580, 7
        %v582 = vsub.s32 0, %v581
        %v583 = vrot.slane %v354, %v582
        %v585 = vmul.f32 %v574, %v583
        %s586 = scalar_lea.vmem [#allocation2], 8
        %v587 = vld [vmem:[%s586] sm:$0xf]
        %v588 = vld [vmem:[%s586 + $0x4] sm:$0xf]
        %s589 = scalar_lea.vmem %s4, 1
        %v590 = vld [vmem:[%s589] sm:$0x1]
        %v592 = vlaneseq
        %v593 = vshrl.u32 %v592, 7
        %v594 = vsub.s32 0, %v593
        %v595 = vrot.slane %v590, %v594
        %v599 = vunpack.c.l.b16 %v587
        %v600 = vunpack.c.l.b16 %v588
        %v601 = vpack.c.b16 %v600, %v599
        %603 = vmatprep.subr.bf16.mxu0 0
        %604 = vmatpush1.bf16.msra.mxu0 0
        %605 = vmatprep.subr.bf16.mxu0 0
        %606 = vmatpush1.bf16.msra.mxu0 0
        %607 = vmatprep.subr.bf16.mxu0 0
        %608 = vmatpush1.bf16.msra.mxu0 0
        %609 = vmatprep.subr.bf16.mxu0 0
        %610 = vmatpush1.bf16.msra.mxu0 0
        %611 = vmatprep.subr.bf16.mxu0 0
        %612 = vmatpush1.bf16.msra.mxu0 0
        %613 = vmatprep.subr.bf16.mxu0 0
        %614 = vmatpush1.bf16.msra.mxu0 0
        %615 = vmatprep.subr.bf16.mxu0 0
        %616 = vmatpush1.bf16.msra.mxu0 0
        %617 = vmatprep.subr.bf16.mxu0 0
        %618 = vmatpush1.bf16.msra.mxu0 %v601
        %619 = vmatprep.subr.bf16.mxu0 0
        %620 = vmatpush2.bf16.msra.mxu0 0
        %621 = vmatprep.subr.bf16.mxu0 0
        %622 = vmatpush2.bf16.msra.mxu0 0
        %623 = vmatprep.subr.bf16.mxu0 0
        %624 = vmatpush2.bf16.msra.mxu0 0
        %625 = vmatprep.subr.bf16.mxu0 0
        %626 = vmatpush2.bf16.msra.mxu0 0
        %627 = vmatprep.subr.bf16.mxu0 0
        %628 = vmatpush2.bf16.msra.mxu0 0
        %629 = vmatprep.subr.bf16.mxu0 0
        %630 = vmatpush2.bf16.msra.mxu0 0
        %631 = vmatprep.subr.bf16.mxu0 0
        %632 = vmatpush2.bf16.msra.mxu0 0
        %633 = vmatprep.subr.bf16.mxu0 0
        %634 = vmatpush2.bf16.msra.mxu0 0
        %635 = vmatprep.mubr.bf16.mxu0 0
        %636 = vmatmul.mubr.bf16.gmra.mxu0 %v372
        %v637 = vpop.f32.mrf.mxu0
        %v638 = vadd.f32 %v595, %v637
        %v639 = vpop.f32.mrf.mxu0
        %v640 = vpop.f32.mrf.mxu0
        %v641 = vpop.f32.mrf.mxu0
        %642 = vdwg.mxu0
        %s643 = scalar_lea.vmem [#allocation2], 24
        %v644 = vld [vmem:[%s643] sm:$0xf]
        %v645 = vld [vmem:[%s643 + $0x4] sm:$0xf]
        %s646 = scalar_lea.vmem %s4, 3
        %v647 = vld [vmem:[%s646] sm:$0x1]
        %v649 = vlaneseq
        %v650 = vshrl.u32 %v649, 7
        %v651 = vsub.s32 0, %v650
        %v652 = vrot.slane %v647, %v651
        %v656 = vunpack.c.l.b16 %v644
        %v657 = vunpack.c.l.b16 %v645
        %v658 = vpack.c.b16 %v657, %v656
        %660 = vmatprep.subr.bf16.mxu0 0
        %661 = vmatpush1.bf16.msra.mxu0 0
        %662 = vmatprep.subr.bf16.mxu0 0
        %663 = vmatpush1.bf16.msra.mxu0 0
        %664 = vmatprep.subr.bf16.mxu0 0
        %665 = vmatpush1.bf16.msra.mxu0 0
        %666 = vmatprep.subr.bf16.mxu0 0
        %667 = vmatpush1.bf16.msra.mxu0 0
        %668 = vmatprep.subr.bf16.mxu0 0
        %669 = vmatpush1.bf16.msra.mxu0 0
        %670 = vmatprep.subr.bf16.mxu0 0
        %671 = vmatpush1.bf16.msra.mxu0 0
        %672 = vmatprep.subr.bf16.mxu0 0
        %673 = vmatpush1.bf16.msra.mxu0 0
        %674 = vmatprep.subr.bf16.mxu0 0
        %675 = vmatpush1.bf16.msra.mxu0 %v658
        %676 = vmatprep.subr.bf16.mxu0 0
        %677 = vmatpush2.bf16.msra.mxu0 0
        %678 = vmatprep.subr.bf16.mxu0 0
        %679 = vmatpush2.bf16.msra.mxu0 0
        %680 = vmatprep.subr.bf16.mxu0 0
        %681 = vmatpush2.bf16.msra.mxu0 0
        %682 = vmatprep.subr.bf16.mxu0 0
        %683 = vmatpush2.bf16.msra.mxu0 0
        %684 = vmatprep.subr.bf16.mxu0 0
        %685 = vmatpush2.bf16.msra.mxu0 0
        %686 = vmatprep.subr.bf16.mxu0 0
        %687 = vmatpush2.bf16.msra.mxu0 0
        %688 = vmatprep.subr.bf16.mxu0 0
        %689 = vmatpush2.bf16.msra.mxu0 0
        %690 = vmatprep.subr.bf16.mxu0 0
        %691 = vmatpush2.bf16.msra.mxu0 0
        %692 = vmatprep.mubr.bf16.mxu0 0
        %693 = vmatmul.mubr.bf16.gmra.mxu0 %v432
        %v694 = vpop.f32.mrf.mxu0
        %v695 = vadd.f32 %v652, %v694
        %v696 = vpop.f32.mrf.mxu0
        %v697 = vpop.f32.mrf.mxu0
        %v698 = vpop.f32.mrf.mxu0
        %699 = vdwg.mxu0
        %s700 = scalar_lea.vmem [#allocation2], 40
        %v701 = vld [vmem:[%s700] sm:$0xf]
        %v702 = vld [vmem:[%s700 + $0x4] sm:$0xf]
        %s703 = scalar_lea.vmem %s4, 5
        %v704 = vld [vmem:[%s703] sm:$0x1]
        %v706 = vlaneseq
        %v707 = vshrl.u32 %v706, 7
        %v708 = vsub.s32 0, %v707
        %v709 = vrot.slane %v704, %v708
        %v713 = vunpack.c.l.b16 %v701
        %v714 = vunpack.c.l.b16 %v702
        %v715 = vpack.c.b16 %v714, %v713
        %717 = vmatprep.subr.bf16.mxu0 0
        %718 = vmatpush1.bf16.msra.mxu0 0
        %719 = vmatprep.subr.bf16.mxu0 0
        %720 = vmatpush1.bf16.msra.mxu0 0
        %721 = vmatprep.subr.bf16.mxu0 0
        %722 = vmatpush1.bf16.msra.mxu0 0
        %723 = vmatprep.subr.bf16.mxu0 0
        %724 = vmatpush1.bf16.msra.mxu0 0
        %725 = vmatprep.subr.bf16.mxu0 0
        %726 = vmatpush1.bf16.msra.mxu0 0
        %727 = vmatprep.subr.bf16.mxu0 0
        %728 = vmatpush1.bf16.msra.mxu0 0
        %729 = vmatprep.subr.bf16.mxu0 0
        %730 = vmatpush1.bf16.msra.mxu0 0
        %731 = vmatprep.subr.bf16.mxu0 0
        %732 = vmatpush1.bf16.msra.mxu0 %v715
        %733 = vmatprep.subr.bf16.mxu0 0
        %734 = vmatpush2.bf16.msra.mxu0 0
        %735 = vmatprep.subr.bf16.mxu0 0
        %736 = vmatpush2.bf16.msra.mxu0 0
        %737 = vmatprep.subr.bf16.mxu0 0
        %738 = vmatpush2.bf16.msra.mxu0 0
        %739 = vmatprep.subr.bf16.mxu0 0
        %740 = vmatpush2.bf16.msra.mxu0 0
        %741 = vmatprep.subr.bf16.mxu0 0
        %742 = vmatpush2.bf16.msra.mxu0 0
        %743 = vmatprep.subr.bf16.mxu0 0
        %744 = vmatpush2.bf16.msra.mxu0 0
        %745 = vmatprep.subr.bf16.mxu0 0
        %746 = vmatpush2.bf16.msra.mxu0 0
        %747 = vmatprep.subr.bf16.mxu0 0
        %748 = vmatpush2.bf16.msra.mxu0 0
        %749 = vmatprep.mubr.bf16.mxu0 0
        %750 = vmatmul.mubr.bf16.gmra.mxu0 %v432
        %v751 = vpop.f32.mrf.mxu0
        %v752 = vadd.f32 %v709, %v751
        %v753 = vpop.f32.mrf.mxu0
        %v754 = vpop.f32.mrf.mxu0
        %v755 = vpop.f32.mrf.mxu0
        %756 = vdwg.mxu0
        %v757 = vpack.c.bf16 %v638, %v638
        %v758 = vpack.c.bf16 %v695, %v695
        %v760 = vsel %vm370, %v757, 0
        %v763 = vsel %vm370, %v758, 0
        %765 = vmatprep.subr.bf16.mxu0 0
        %766 = vmatpush1.bf16.xpose.msra.mxu0 0
        %767 = vmatprep.subr.bf16.mxu0 0
        %768 = vmatpush1.bf16.xpose.msra.mxu0 0
        %769 = vmatprep.subr.bf16.mxu0 0
        %770 = vmatpush1.bf16.xpose.msra.mxu0 0
        %771 = vmatprep.subr.bf16.mxu0 0
        %772 = vmatpush1.bf16.xpose.msra.mxu0 0
        %773 = vmatprep.subr.bf16.mxu0 0
        %774 = vmatpush1.bf16.xpose.msra.mxu0 0
        %775 = vmatprep.subr.bf16.mxu0 0
        %776 = vmatpush1.bf16.xpose.msra.mxu0 0
        %777 = vmatprep.subr.bf16.mxu0 0
        %778 = vmatpush1.bf16.xpose.msra.mxu0 0
        %779 = vmatprep.subr.bf16.mxu0 0
        %780 = vmatpush1.bf16.xpose.msra.mxu0 %v763
        %781 = vmatprep.subr.bf16.mxu0 0
        %782 = vmatpush2.bf16.xpose.msra.mxu0 0
        %783 = vmatprep.subr.bf16.mxu0 0
        %784 = vmatpush2.bf16.xpose.msra.mxu0 0
        %785 = vmatprep.subr.bf16.mxu0 0
        %786 = vmatpush2.bf16.xpose.msra.mxu0 0
        %787 = vmatprep.subr.bf16.mxu0 0
        %788 = vmatpush2.bf16.xpose.msra.mxu0 0
        %789 = vmatprep.subr.bf16.mxu0 0
        %790 = vmatpush2.bf16.xpose.msra.mxu0 0
        %791 = vmatprep.subr.bf16.mxu0 0
        %792 = vmatpush2.bf16.xpose.msra.mxu0 0
        %793 = vmatprep.subr.bf16.mxu0 0
        %794 = vmatpush2.bf16.xpose.msra.mxu0 0
        %795 = vmatprep.subr.bf16.mxu0 0
        %796 = vmatpush2.bf16.xpose.msra.mxu0 0
        %797 = vmatprep.mubr.bf16.mxu0 0
        %798 = vmatmul.mubr.bf16.gmra.mxu0 %v760
        %v799 = vpop.f32.mrf.mxu0
        %v800 = vadd.f32 0.0, %v799
        %v801 = vpop.f32.mrf.mxu0
        %v802 = vpop.f32.mrf.mxu0
        %v803 = vpop.f32.mrf.mxu0
        %804 = vdwg.mxu0
        %v805 = vmul.f32 %v800, %v583
        %v806 = vsub.f32 %v805, %v585
        %v807 = vmul.f32 %v806, 1.442695
        %v808 = vpow.pop %v807
        %v809 = vadd.f32 %v808, 1.0
        %v810 = vrcp.pop %v809
        %v811 = vsub.f32 1.0, %v810
        %v812 = vpack.c.bf16 %v810, %v810
        %v813 = vpack.c.bf16 %v526, %v526
        %vm814 = vcmask 39936
        %v816 = vsel %vm814, %v812, 0
        %vm818 = vcmask 1041408
        %vm819 = vcmask 1042432
        %v820 = vsel %vm818, 4294967295, 65535
        %v821 = vsel %vm819, %v820, 0
        %v823 = vand.u32 %v813, %v821
        %825 = vmatprep.subr.bf16.mxu0 0
        %826 = vmatpush1.bf16.msra.mxu0 0
        %827 = vmatprep.subr.bf16.mxu0 0
        %828 = vmatpush1.bf16.msra.mxu0 0
        %829 = vmatprep.subr.bf16.mxu0 0
        %830 = vmatpush1.bf16.msra.mxu0 0
        %831 = vmatprep.subr.bf16.mxu0 0
        %832 = vmatpush1.bf16.msra.mxu0 0
        %833 = vmatprep.subr.bf16.mxu0 0
        %834 = vmatpush1.bf16.msra.mxu0 0
        %835 = vmatprep.subr.bf16.mxu0 0
        %836 = vmatpush1.bf16.msra.mxu0 0
        %837 = vmatprep.subr.bf16.mxu0 0
        %838 = vmatpush1.bf16.msra.mxu0 0
        %839 = vmatprep.subr.bf16.mxu0 0
        %840 = vmatpush1.bf16.msra.mxu0 %v823
        %841 = vmatprep.subr.bf16.mxu0 0
        %842 = vmatpush2.bf16.msra.mxu0 0
        %843 = vmatprep.subr.bf16.mxu0 0
        %844 = vmatpush2.bf16.msra.mxu0 0
        %845 = vmatprep.subr.bf16.mxu0 0
        %846 = vmatpush2.bf16.msra.mxu0 0
        %847 = vmatprep.subr.bf16.mxu0 0
        %848 = vmatpush2.bf16.msra.mxu0 0
        %849 = vmatprep.subr.bf16.mxu0 0
        %850 = vmatpush2.bf16.msra.mxu0 0
        %851 = vmatprep.subr.bf16.mxu0 0
        %852 = vmatpush2.bf16.msra.mxu0 0
        %853 = vmatprep.subr.bf16.mxu0 0
        %854 = vmatpush2.bf16.msra.mxu0 0
        %855 = vmatprep.subr.bf16.mxu0 0
        %856 = vmatpush2.bf16.msra.mxu0 0
        %857 = vmatprep.mubr.bf16.mxu0 0
        %858 = vmatmul.mubr.bf16.gmra.mxu0 %v816
        %v859 = vpop.f32.mrf.mxu0
        %v860 = vadd.f32 0.0, %v859
        %v861 = vpop.f32.mrf.mxu0
        %v862 = vpop.f32.mrf.mxu0
        %v863 = vpop.f32.mrf.mxu0
        %864 = vdwg.mxu0
        %v865 = vpack.c.bf16 %v860, %v860
        %v866 = vld [vmem:[%s5] sm:$0xf]
        %v867 = vld [vmem:[%s5 + $0x4] sm:$0xf]
        %v868 = vpack.c.bf16 %v811, %v811
        %v869 = vpack.c.bf16 %v752, %v752
        %v871 = vsel %vm814, %v868, 0
        %v874 = vand.u32 %v869, %v821
        %876 = vmatprep.subr.bf16.mxu0 0
        %877 = vmatpush1.bf16.msra.mxu0 0
        %878 = vmatprep.subr.bf16.mxu0 0
        %879 = vmatpush1.bf16.msra.mxu0 0
        %880 = vmatprep.subr.bf16.mxu0 0
        %881 = vmatpush1.bf16.msra.mxu0 0
        %882 = vmatprep.subr.bf16.mxu0 0
        %883 = vmatpush1.bf16.msra.mxu0 0
        %884 = vmatprep.subr.bf16.mxu0 0
        %885 = vmatpush1.bf16.msra.mxu0 0
        %886 = vmatprep.subr.bf16.mxu0 0
        %887 = vmatpush1.bf16.msra.mxu0 0
        %888 = vmatprep.subr.bf16.mxu0 0
        %889 = vmatpush1.bf16.msra.mxu0 0
        %890 = vmatprep.subr.bf16.mxu0 0
        %891 = vmatpush1.bf16.msra.mxu0 %v874
        %892 = vmatprep.subr.bf16.mxu0 0
        %893 = vmatpush2.bf16.msra.mxu0 0
        %894 = vmatprep.subr.bf16.mxu0 0
        %895 = vmatpush2.bf16.msra.mxu0 0
        %896 = vmatprep.subr.bf16.mxu0 0
        %897 = vmatpush2.bf16.msra.mxu0 0
        %898 = vmatprep.subr.bf16.mxu0 0
        %899 = vmatpush2.bf16.msra.mxu0 0
        %900 = vmatprep.subr.bf16.mxu0 0
        %901 = vmatpush2.bf16.msra.mxu0 0
        %902 = vmatprep.subr.bf16.mxu0 0
        %903 = vmatpush2.bf16.msra.mxu0 0
        %904 = vmatprep.subr.bf16.mxu0 0
        %905 = vmatpush2.bf16.msra.mxu0 0
        %906 = vmatprep.subr.bf16.mxu0 0
        %907 = vmatpush2.bf16.msra.mxu0 0
        %908 = vmatprep.mubr.bf16.mxu0 0
        %909 = vmatmul.mubr.bf16.gmra.mxu0 %v871
        %v910 = vpop.f32.mrf.mxu0
        %v911 = vadd.f32 0.0, %v910
        %v912 = vpop.f32.mrf.mxu0
        %v913 = vpop.f32.mrf.mxu0
        %v914 = vpop.f32.mrf.mxu0
        %915 = vdwg.mxu0
        %v916 = vpack.c.bf16 %v911, %v911
        %s917 = scalar_lea.vmem %s5, 8
        %v918 = vld [vmem:[%s917] sm:$0xf]
        %v919 = vld [vmem:[%s917 + $0x4] sm:$0xf]
        %v922 = vunpack.c.l.b16 %v918
        %v923 = vunpack.c.l.b16 %v919
        %v924 = vpack.c.b16 %v923, %v922
        %v927 = vsel %vm370, %v916, 0
        %929 = vmatprep.subr.bf16.mxu0 0
        %930 = vmatpush1.bf16.msra.mxu0 0
        %931 = vmatprep.subr.bf16.mxu0 0
        %932 = vmatpush1.bf16.msra.mxu0 0
        %933 = vmatprep.subr.bf16.mxu0 0
        %934 = vmatpush1.bf16.msra.mxu0 0
        %935 = vmatprep.subr.bf16.mxu0 0
        %936 = vmatpush1.bf16.msra.mxu0 0
        %937 = vmatprep.subr.bf16.mxu0 0
        %938 = vmatpush1.bf16.msra.mxu0 0
        %939 = vmatprep.subr.bf16.mxu0 0
        %940 = vmatpush1.bf16.msra.mxu0 0
        %941 = vmatprep.subr.bf16.mxu0 0
        %942 = vmatpush1.bf16.msra.mxu0 0
        %943 = vmatprep.subr.bf16.mxu0 0
        %944 = vmatpush1.bf16.msra.mxu0 %v924
        %945 = vmatprep.subr.bf16.mxu0 0
        %946 = vmatpush2.bf16.msra.mxu0 0
        %947 = vmatprep.subr.bf16.mxu0 0
        %948 = vmatpush2.bf16.msra.mxu0 0
        %949 = vmatprep.subr.bf16.mxu0 0
        %950 = vmatpush2.bf16.msra.mxu0 0
        %951 = vmatprep.subr.bf16.mxu0 0
        %952 = vmatpush2.bf16.msra.mxu0 0
        %953 = vmatprep.subr.bf16.mxu0 0
        %954 = vmatpush2.bf16.msra.mxu0 0
        %955 = vmatprep.subr.bf16.mxu0 0
        %956 = vmatpush2.bf16.msra.mxu0 0
        %957 = vmatprep.subr.bf16.mxu0 0
        %958 = vmatpush2.bf16.msra.mxu0 0
        %959 = vmatprep.subr.bf16.mxu0 0
        %960 = vmatpush2.bf16.msra.mxu0 0
        %961 = vmatprep.mubr.bf16.mxu0 0
        %962 = vmatmul.mubr.bf16.gmra.mxu0 %v927
        %v963 = vpop.f32.mrf.mxu0
        %v964 = vadd.f32 0.0, %v963
        %v965 = vpop.f32.mrf.mxu0
        %v966 = vpop.f32.mrf.mxu0
        %v967 = vpop.f32.mrf.mxu0
        %968 = vdwg.mxu0
        %v971 = vunpack.c.l.b16 %v866
        %v972 = vunpack.c.l.b16 %v867
        %v973 = vpack.c.b16 %v972, %v971
        %v976 = vsel %vm370, %v865, 0
        %978 = vmatprep.subr.bf16.mxu0 0
        %979 = vmatpush1.bf16.msra.mxu0 0
        %980 = vmatprep.subr.bf16.mxu0 0
        %981 = vmatpush1.bf16.msra.mxu0 0
        %982 = vmatprep.subr.bf16.mxu0 0
        %983 = vmatpush1.bf16.msra.mxu0 0
        %984 = vmatprep.subr.bf16.mxu0 0
        %985 = vmatpush1.bf16.msra.mxu0 0
        %986 = vmatprep.subr.bf16.mxu0 0
        %987 = vmatpush1.bf16.msra.mxu0 0
        %988 = vmatprep.subr.bf16.mxu0 0
        %989 = vmatpush1.bf16.msra.mxu0 0
        %990 = vmatprep.subr.bf16.mxu0 0
        %991 = vmatpush1.bf16.msra.mxu0 0
        %992 = vmatprep.subr.bf16.mxu0 0
        %993 = vmatpush1.bf16.msra.mxu0 %v973
        %994 = vmatprep.subr.bf16.mxu0 0
        %995 = vmatpush2.bf16.msra.mxu0 0
        %996 = vmatprep.subr.bf16.mxu0 0
        %997 = vmatpush2.bf16.msra.mxu0 0
        %998 = vmatprep.subr.bf16.mxu0 0
        %999 = vmatpush2.bf16.msra.mxu0 0
        %1000 = vmatprep.subr.bf16.mxu0 0
        %1001 = vmatpush2.bf16.msra.mxu0 0
        %1002 = vmatprep.subr.bf16.mxu0 0
        %1003 = vmatpush2.bf16.msra.mxu0 0
        %1004 = vmatprep.subr.bf16.mxu0 0
        %1005 = vmatpush2.bf16.msra.mxu0 0
        %1006 = vmatprep.subr.bf16.mxu0 0
        %1007 = vmatpush2.bf16.msra.mxu0 0
        %1008 = vmatprep.subr.bf16.mxu0 0
        %1009 = vmatpush2.bf16.msra.mxu0 0
        %1010 = vmatprep.mubr.bf16.mxu0 0
        %1011 = vmatmul.mubr.bf16.gmra.mxu0 %v976
        %v1012 = vpop.f32.mrf.mxu0
        %v1013 = vadd.f32 %v964, %v1012
        %v1014 = vpop.f32.mrf.mxu0
        %v1015 = vpop.f32.mrf.mxu0
        %v1016 = vpop.f32.mrf.mxu0
        %1017 = vdwg.mxu0
        %v1018 = vld [vmem:[%s6] sm:$0x1]
        %v1020 = vlaneseq
        %v1021 = vshrl.u32 %v1020, 7
        %v1022 = vsub.s32 0, %v1021
        %v1023 = vrot.slane %v1018, %v1022
        %v1025 = vadd.f32 %v1013, %v1023
        %vm1026 = vcmask 126976
        %1027 = vst.msk [vmem:[%s350] sm:$0x1f] %vm1026, %v1025
        %p1028 = scmp.lt.s32.totalorder %s23, 1
        %s1029 = scalar_select %p1028, %s23, 1
        %p1030 = scmp.lt.s32.totalorder %s24, 0
        %s1031 = scalar_select %p1030, %s24, 0
        %s1032 = sadd.s32 %s1031, %s1029
        %s1033 = smul.addr %s1032, 8
        %s1034 = scalar_lea.vmem %s7, %s1033
        // Predicated region
        $region53: #{tpu_custom_call.1} parent=47 // pred_check
          %p1035 = pneg %p215
        $region54: #{tpu_custom_call.1} parent=47 // pred_check_branch
          %1037 = sbr.rel (%p1035) target = $region56
        $region55: #{tpu_custom_call.1} parent=47 // pred_region
          _
        $region56: #{tpu_custom_call.1} parent=47 // pred_fallthru
          _
      $region48: #{tpu_custom_call.1} parent=5 // pred_fallthru
        _
      %p1038 = scmp.le.s32.totalorder 2, %s14
      // Predicated region
      $region57: #{tpu_custom_call.1} parent=5 // pred_check
        %p1039 = pneg %p1038
      $region58: #{tpu_custom_call.1} parent=5 // pred_check_branch
        %1041 = sbr.rel (%p1039) target = $region60
      $region59: #{tpu_custom_call.1} parent=5 // pred_region
        %s1042 = ssub.s32 %s14, 2
        // Predicated region
        $region61: #{tpu_custom_call.1} parent=59 // pred_check
          %p1043 = pneg %p221
        $region62: #{tpu_custom_call.1} parent=59 // pred_check_branch
          %1045 = sbr.rel (%p1043) target = $region64
        $region63: #{tpu_custom_call.1} parent=59 // pred_region
          %p1046 = scmp.lt.s32.totalorder %s25, 1
          %s1047 = scalar_select %p1046, %s25, 1
          %p1048 = scmp.lt.s32.totalorder %s26, 0
          %s1049 = scalar_select %p1048, %s26, 0
          %s1050 = sadd.s32 %s1049, %s1047
          %s1051 = smul.addr %s1050, 8
          %s1052 = scalar_lea.vmem %s7, %s1051
        $region64: #{tpu_custom_call.1} parent=59 // pred_fallthru
          _
      $region60: #{tpu_custom_call.1} parent=5 // pred_fallthru
        _
    $region6: #{tpu_custom_call.1} parent=1 // loop_footer
      %s18 = sadd.s32 1, %s14
    $region7: #{tpu_custom_call.1} parent=1 // loop_footer_branch
      %13 = sbr.rel target = $region3
    $region8: #{tpu_custom_call.1} parent=1 // loop_exit
      _
    %1053 = vsyncpa [#allocation3], 1
    %s1054 = scalar_lea.sflag [#allocation3], 1
    %1055 = vsyncpa %s1054, 1

</llo_original>
